<compile_context>
chip_gen: v6e
topology: v6e:2x2x1
jax: 0.10.0
libtpu: 0.0.40
codegen_flags: <defaults>
</compile_context>

<pallas_src>
import jax
import jax.numpy as jnp
from jax import lax
from jax.experimental import pallas as pl
from jax.experimental.pallas import tpu as pltpu


def _round_up(x, m):
    return ((x + m - 1) // m) * m


def _pick_tiles(Q, tk_target, nsplit):
    """Pick the queue tile size TK and padded queue length Q_pad.

    Prefers the largest TK <= tk_target (multiple of 8 sublanes) such that the
    queue splits into an exact number of tiles per core-split (no pad rows
    streamed).  Falls back to minimal zero padding otherwise.
    """
    tk_target = max(8, _round_up(min(tk_target, max(Q, 8)), 8))
    if Q % 8 == 0:
        # No padding at all: Q == nsplit * tiles_per_split * TK.
        for tk in range(min(tk_target, Q), 0, -8):
            if Q % (tk * nsplit) == 0:
                return tk, Q
        # No padding inside a split; pad only whole tiles at the end.
        for tk in range(min(tk_target, Q), 0, -8):
            if Q % tk == 0:
                ntiles = _round_up(Q // tk, nsplit)
                return tk, ntiles * tk
    tk = tk_target
    return tk, _round_up(Q, tk * nsplit)


# --------------------------------------------------------------------------
# Kernel 1: one-shot prep (projection + normalization + in-batch scores)
# --------------------------------------------------------------------------
def _prep_kernel(temp_ref, q_ref, k_ref, w_ref, b_ref,
                 qs_ref, kn_ref, diag_ref, m0_ref, l0_ref):
    temp = temp_ref[0, 0]                       # logit_scale.exp() (SMEM)

    # Linear(768 -> 1024): bf16 x bf16 -> f32 on the MXU, bias added in f32.
    q_proj = jnp.dot(q_ref[...].astype(jnp.bfloat16),
                     w_ref[...].astype(jnp.bfloat16),
                     preferred_element_type=jnp.float32) + b_ref[...]

    # L2 normalization in f32.
    q_n = q_proj * lax.rsqrt(jnp.sum(q_proj * q_proj, axis=-1, keepdims=True))
    k = k_ref[...]
    k_n = k * lax.rsqrt(jnp.sum(k * k, axis=-1, keepdims=True))

    # Pre-scale the query by temp so the streaming kernel needs no scalar mul.
    q_s = (q_n * temp).astype(jnp.bfloat16)
    k_b = k_n.astype(jnp.bfloat16)
    qs_ref[...] = q_s
    kn_ref[...] = k_b

    # In-batch scores (first B columns of the full score matrix), bf16 MXU.
    s_kk = lax.dot_general(q_s, k_b, (((1,), (1,)), ((), ())),
                           preferred_element_type=jnp.float32)   # (B, B)

    # Positive logits = diagonal of s_kk (labels = arange(B)); taken from the
    # same bf16 matmul so numerator and denominator match bit-for-bit.
    row = lax.broadcasted_iota(jnp.int32, s_kk.shape, 0)
    col = lax.broadcasted_iota(jnp.int32, s_kk.shape, 1)
    diag_ref[...] = jnp.sum(jnp.where(row == col, s_kk, 0.0),
                            axis=-1, keepdims=True)

    # Seed the online logsumexp with the in-batch keys.
    m0 = jnp.max(s_kk, axis=-1, keepdims=True)
    m0_ref[...] = m0
    l0_ref[...] = jnp.sum(jnp.exp(s_kk - m0), axis=-1, keepdims=True)


# --------------------------------------------------------------------------
# Kernel 2: streamed online logsumexp over the negatives queue
# --------------------------------------------------------------------------
def _stream_kernel(qs_ref, queue_ref, m_ref, l_ref):
    t = pl.program_id(1)

    @pl.when(t == 0)
    def _init():
        m_ref[...] = jnp.full_like(m_ref, -jnp.inf)
        l_ref[...] = jnp.zeros_like(l_ref)

    # scores vs this queue tile; temp is already folded into qs.
    s = lax.dot_general(qs_ref[...], queue_ref[...],
                        (((1,), (1,)), ((), ())),
                        preferred_element_type=jnp.float32)       # (B, TK)

    m_prev = m_ref[0]                                             # (B, 1)
    m_new = jnp.maximum(m_prev, jnp.max(s, axis=-1, keepdims=True))
    l_ref[0] = jnp.exp(m_prev - m_new) * l_ref[0] + jnp.sum(
        jnp.exp(s - m_new), axis=-1, keepdims=True)
    m_ref[0] = m_new


# --------------------------------------------------------------------------
# Wrapper
# --------------------------------------------------------------------------
def simcle_forward(q_features, k_features, queue, w_proj, b_proj, logit_scale,
                   queue_len=0, *, tk_target=4096, nsplit=2):
    """Pallas implementation of SimCLE.forward's contrastive head.

    q_features:  (B, 768)   pooler output of q_transformer (f32)
    k_features:  (B, 1024)  pooler output of k_transformer (f32)
    queue:       (Q, 1024)  negatives queue -- pass bf16 to avoid any cast pass
    w_proj:      (768, 1024) proj weight stored transposed; b_proj: (1, 1024)
    logit_scale: (1, 1)
    Returns (loss, img_queue) matching criterion's outputs (img_queue in bf16).
    """
    B, D_in = q_features.shape
    _, D_k = k_features.shape
    Q = queue.shape[0]
    assert k_features.shape == (B, D_k)
    assert w_proj.shape == (D_in, D_k)
    assert queue.shape == (Q, D_k)

    # temp = logit_scale.exp(), computed once (matches forward()).
    temp = jnp.exp(logit_scale.astype(jnp.float32)).reshape(1, 1)

    # ---- prep kernel: projection, normalization, in-batch scores ----------
    q_s, k_n, diag, m0, l0 = pl.pallas_call(
        _prep_kernel,
        grid=(1,),
        in_specs=[
            pl.BlockSpec(memory_space=pltpu.MemorySpace.SMEM),      # temp
            pl.BlockSpec((B, D_in), lambda i: (0, 0)),              # q_features
            pl.BlockSpec((B, D_k), lambda i: (0, 0)),               # k_features
            pl.BlockSpec((D_in, D_k), lambda i: (0, 0)),            # W
            pl.BlockSpec((1, D_k), lambda i: (0, 0)),               # b
        ],
        out_specs=(
            pl.BlockSpec((B, D_k), lambda i: (0, 0)),               # temp*q_n
            pl.BlockSpec((B, D_k), lambda i: (0, 0)),               # k_n (bf16)
            pl.BlockSpec((B, 1), lambda i: (0, 0)),                 # diag
            pl.BlockSpec((B, 1), lambda i: (0, 0)),                 # m0
            pl.BlockSpec((B, 1), lambda i: (0, 0)),                 # l0
        ),
        out_shape=(
            jax.ShapeDtypeStruct((B, D_k), jnp.bfloat16),
            jax.ShapeDtypeStruct((B, D_k), jnp.bfloat16),
            jax.ShapeDtypeStruct((B, 1), jnp.float32),
            jax.ShapeDtypeStruct((B, 1), jnp.float32),
            jax.ShapeDtypeStruct((B, 1), jnp.float32),
        ),
    )(temp, q_features, k_features, w_proj, b_proj)

    # Negatives queue lives persistently in bf16; only cast if the caller
    # handed us something else (the demo / training loop should pass bf16).
    queue_bf = queue if queue.dtype == jnp.bfloat16 else queue.astype(jnp.bfloat16)

    # ---- stream kernel: online logsumexp over the queue --------------------
    if Q == 0:
        # Empty queue (e.g. before it is populated): in-batch keys only.
        m_all = m0[:, 0]
        l_all = l0[:, 0]
    else:
        TK, Q_pad = _pick_tiles(Q, tk_target, nsplit)
        n_pad = Q_pad - Q
        queue_stream = (jnp.pad(queue_bf, ((0, n_pad), (0, 0)))
                        if n_pad else queue_bf)
        tiles_per_split = Q_pad // (TK * nsplit)

        m_p, l_p = pl.pallas_call(
            _stream_kernel,
            grid=(nsplit, tiles_per_split),
            in_specs=[
                pl.BlockSpec((B, D_k), lambda s, t: (0, 0)),         # temp*q_n
                pl.BlockSpec((TK, D_k),
                             lambda s, t: (s * tiles_per_split + t, 0)),
            ],
            out_specs=(
                pl.BlockSpec((1, B, 1), lambda s, t: (s, 0, 0)),     # partial m
                pl.BlockSpec((1, B, 1), lambda s, t: (s, 0, 0)),     # partial l
            ),
            out_shape=(
                jax.ShapeDtypeStruct((nsplit, B, 1), jnp.float32),
                jax.ShapeDtypeStruct((nsplit, B, 1), jnp.float32),
            ),
            compiler_params=pltpu.CompilerParams(
                dimension_semantics=("parallel", "arbitrary"),
                vmem_limit_bytes=40 * 1024 * 1024),
        )(q_s, queue_stream)

        # Combine in-batch seed + per-split partial LSEs (tiny (B,) math).
        m_stack = jnp.concatenate([m0.reshape(1, B), m_p[:, :, 0]], axis=0)
        l_stack = jnp.concatenate([l0.reshape(1, B), l_p[:, :, 0]], axis=0)
        m_all = jnp.max(m_stack, axis=0)
        l_all = jnp.sum(l_stack * jnp.exp(m_stack - m_all[None, :]), axis=0)
        if n_pad:
            # Zero-padded queue rows contribute exactly exp(0 - m) each;
            # remove them here instead of masking every tile in the hot loop.
            l_all = l_all - jnp.float32(n_pad) * jnp.exp(-m_all)

    lse = m_all + jnp.log(l_all)                       # (B,)
    loss = jnp.mean(lse - diag[:, 0])

    # criterion's queue update: key = cat([k_n, queue]); queue = key[:keep].
    n = B + Q
    keep = n - max(n - queue_len, 0)
    if keep <= B:
        img_queue = k_n[:keep]
    else:
        img_queue = jnp.concatenate([k_n, queue_bf[:keep - B]], axis=0)

    return loss, img_queue


# --------------------------------------------------------------------------
# Pure-JAX reference (mirrors the PyTorch module) + demo
# --------------------------------------------------------------------------
def _reference_forward(q_features, k_features, queue, w_proj, b_proj,
                       logit_scale):
    q = q_features @ w_proj + b_proj
    q = q / jnp.linalg.norm(q, axis=-1, keepdims=True)
    k = k_features / jnp.linalg.norm(k_features, axis=-1, keepdims=True)
    key_all = jnp.concatenate([k, queue], axis=0)
    temp = jnp.exp(logit_scale[0, 0])
    scores = jnp.einsum('ab,cb->ac', q, key_all) * temp
    labels = jnp.arange(q.shape[0])
    logp = scores - jax.scipy.special.logsumexp(scores, axis=-1, keepdims=True)
    return -jnp.mean(logp[labels, labels])


if __name__ == "__main__":
    B, D_IN, D_K = 8, 768, 1024        # Linear(768, 1024) is fixed by the module

    key = jax.random.PRNGKey(0)
    k1, k2, k3, k4 = jax.random.split(key, 4)

    # Synthetic pooler_output features standing in for the external transformers.
    q_features = jax.random.normal(k1, (B, D_IN), dtype=jnp.float32)
    k_features = jax.random.normal(k2, (B, D_K), dtype=jnp.float32)
    # nn.Linear(768, 1024): weight (1024, 768) stored transposed; bias (1, 1024).
    w_proj = (jax.random.normal(k4, (D_K, D_IN), dtype=jnp.float32) * 0.02).T
    b_proj = jnp.zeros((1, D_K), dtype=jnp.float32)
    logit_scale = jnp.ones((1, 1), dtype=jnp.float32)   # nn.Parameter(torch.ones([]))

    def make_queue(n):
        if n == 0:
            return jnp.zeros((0, D_K), jnp.bfloat16)
        raw = jax.random.normal(k3, (n, D_K), dtype=jnp.float32)
        qn = raw / jnp.linalg.norm(raw, axis=-1, keepdims=True)
        return qn.astype(jnp.bfloat16)   # queue is kept persistently in bf16

    # (queue rows, tk_target) -- exercise multi-tile streaming, the ragged
    # zero-pad + LSE-correction path, and the empty-queue guard.
    configs = [(64, 16), (20, 4096), (0, 4096)]
    for qlen, tk_target in configs:
        queue = make_queue(qlen)
        loss, img_queue = simcle_forward(
            q_features, k_features, queue, w_proj, b_proj, logit_scale,
            queue_len=0, tk_target=tk_target)          # forward() uses queue_len=0
        loss = jax.block_until_ready(loss)
        ref = _reference_forward(q_features, k_features,
                                 queue.astype(jnp.float32),
                                 w_proj, b_proj, logit_scale)
        assert jnp.allclose(loss, ref, rtol=2e-2, atol=2e-2), (qlen, loss, ref)
        assert img_queue.shape == (0, D_K)              # queue_len=0 -> empty queue

    # queue_len > 0 path of criterion's queue update (shape/dtype check).
    queue = make_queue(64)
    loss, img_queue = simcle_forward(q_features, k_features, queue,
                                     w_proj, b_proj, logit_scale,
                                     queue_len=32, tk_target=16)
    jax.block_until_ready(loss)
    assert img_queue.shape == (32, D_K) and img_queue.dtype == jnp.bfloat16

    print("KERNEL_OK")
</pallas_src>

<mosaic_0001>
module attributes {stable_mosaic.version = 11 : i64} {
  func.func @_prep_kernel(%arg0: i32, %arg1: memref<1x1xf32, #tpu.memory_space<smem>>, %arg2: memref<8x768xf32, #tpu.memory_space<vmem>>, %arg3: memref<8x1024xf32, #tpu.memory_space<vmem>>, %arg4: memref<768x1024xf32, #tpu.memory_space<vmem>>, %arg5: memref<1x1024xf32, #tpu.memory_space<vmem>>, %arg6: memref<8x1024xbf16, #tpu.memory_space<vmem>>, %arg7: memref<8x1024xbf16, #tpu.memory_space<vmem>>, %arg8: memref<8x1xf32, #tpu.memory_space<vmem>>, %arg9: memref<8x1xf32, #tpu.memory_space<vmem>>, %arg10: memref<8x1xf32, #tpu.memory_space<vmem>>) attributes {dimension_semantics = [#tpu.dimension_semantics<arbitrary>], iteration_bounds = array<i64: 1>, scalar_prefetch = 0 : i64, scratch_operands = 0 : i64, tpu.core_type = #tpu.core_type<tc>, window_params = [{transform_indices = @transform_0, window_bounds = array<i64: 1, 1>}, {pipeline_mode = #tpu.pipeline_mode<synchronous>, transform_indices = @transform_1, window_bounds = array<i64: 8, 768>}, {pipeline_mode = #tpu.pipeline_mode<synchronous>, transform_indices = @transform_2, window_bounds = array<i64: 8, 1024>}, {pipeline_mode = #tpu.pipeline_mode<synchronous>, transform_indices = @transform_3, window_bounds = array<i64: 768, 1024>}, {pipeline_mode = #tpu.pipeline_mode<synchronous>, transform_indices = @transform_4, window_bounds = array<i64: 1, 1024>}, {pipeline_mode = #tpu.pipeline_mode<synchronous>, transform_indices = @transform_5, window_bounds = array<i64: 8, 1024>}, {pipeline_mode = #tpu.pipeline_mode<synchronous>, transform_indices = @transform_6, window_bounds = array<i64: 8, 1024>}, {pipeline_mode = #tpu.pipeline_mode<synchronous>, transform_indices = @transform_7, window_bounds = array<i64: 8, 1>}, {pipeline_mode = #tpu.pipeline_mode<synchronous>, transform_indices = @transform_8, window_bounds = array<i64: 8, 1>}, {pipeline_mode = #tpu.pipeline_mode<synchronous>, transform_indices = @transform_9, window_bounds = array<i64: 8, 1>}]} {
    %c0 = arith.constant 0 : index
    %c0_0 = arith.constant 0 : index
    %0 = memref.load %arg1[%c0, %c0_0] : memref<1x1xf32, #tpu.memory_space<smem>>
    %c0_1 = arith.constant 0 : index
    %c0_2 = arith.constant 0 : index
    %1 = vector.load %arg2[%c0_1, %c0_2] : memref<8x768xf32, #tpu.memory_space<vmem>>, vector<8x768xf32>
    %2 = arith.truncf %1 : vector<8x768xf32> to vector<8x768xbf16>
    %c0_3 = arith.constant 0 : index
    %c0_4 = arith.constant 0 : index
    %3 = vector.load %arg4[%c0_3, %c0_4] : memref<768x1024xf32, #tpu.memory_space<vmem>>, vector<768x1024xf32>
    %4 = arith.truncf %3 : vector<768x1024xf32> to vector<768x1024xbf16>
    %cst = arith.constant dense<0.000000e+00> : vector<8x1024xf32>
    %5 = tpu.matmul %2, %4, %cst {dimension_numbers = #tpu.dot_dimension_numbers<[1], [0], [0], [1], [0, 0, 1, 1], [], []>} : vector<8x768xbf16>, vector<768x1024xbf16>, vector<8x1024xf32> -> vector<8x1024xf32>
    %c0_5 = arith.constant 0 : index
    %c0_6 = arith.constant 0 : index
    %6 = vector.load %arg5[%c0_5, %c0_6] : memref<1x1024xf32, #tpu.memory_space<vmem>>, vector<1x1024xf32>
    %7 = vector.broadcast %6 : vector<1x1024xf32> to vector<8x1024xf32>
    %8 = arith.addf %5, %7 : vector<8x1024xf32>
    %9 = arith.mulf %8, %8 : vector<8x1024xf32>
    %cst_7 = arith.constant dense<0.000000e+00> : vector<8xf32>
    %10 = vector.multi_reduction <add>, %9, %cst_7 [1] : vector<8x1024xf32> to vector<8xf32>
    %11 = vector.shape_cast %10 : vector<8xf32> to vector<8x1xf32>
    %12 = math.rsqrt %11 : vector<8x1xf32>
    %13 = vector.broadcast %12 : vector<8x1xf32> to vector<8x1024xf32>
    %14 = arith.mulf %8, %13 : vector<8x1024xf32>
    %c0_8 = arith.constant 0 : index
    %c0_9 = arith.constant 0 : index
    %15 = vector.load %arg3[%c0_8, %c0_9] : memref<8x1024xf32, #tpu.memory_space<vmem>>, vector<8x1024xf32>
    %16 = arith.mulf %15, %15 : vector<8x1024xf32>
    %cst_10 = arith.constant dense<0.000000e+00> : vector<8xf32>
    %17 = vector.multi_reduction <add>, %16, %cst_10 [1] : vector<8x1024xf32> to vector<8xf32>
    %18 = vector.shape_cast %17 : vector<8xf32> to vector<8x1xf32>
    %19 = math.rsqrt %18 : vector<8x1xf32>
    %20 = vector.broadcast %19 : vector<8x1xf32> to vector<8x1024xf32>
    %21 = arith.mulf %15, %20 : vector<8x1024xf32>
    %22 = vector.broadcast %0 : f32 to vector<8x1024xf32>
    %23 = arith.mulf %14, %22 : vector<8x1024xf32>
    %24 = arith.truncf %23 : vector<8x1024xf32> to vector<8x1024xbf16>
    %25 = arith.truncf %21 : vector<8x1024xf32> to vector<8x1024xbf16>
    %c0_11 = arith.constant 0 : index
    %c0_12 = arith.constant 0 : index
    %26 = vector.load %arg6[%c0_11, %c0_12] : memref<8x1024xbf16, #tpu.memory_space<vmem>>, vector<8x1024xbf16>
    tpu.vector_store %arg6[%c0_11, %c0_12], %24 {strides = array<i32>} : memref<8x1024xbf16, #tpu.memory_space<vmem>>, vector<8x1024xbf16>,
    %c0_13 = arith.constant 0 : index
    %c0_14 = arith.constant 0 : index
    %27 = vector.load %arg7[%c0_13, %c0_14] : memref<8x1024xbf16, #tpu.memory_space<vmem>>, vector<8x1024xbf16>
    tpu.vector_store %arg7[%c0_13, %c0_14], %25 {strides = array<i32>} : memref<8x1024xbf16, #tpu.memory_space<vmem>>, vector<8x1024xbf16>,
    %cst_15 = arith.constant dense<0.000000e+00> : vector<8x8xf32>
    %28 = tpu.matmul %24, %25, %cst_15 {dimension_numbers = #tpu.dot_dimension_numbers<[1], [1], [0], [0], [0, 0, 1, 0], [], []>} : vector<8x1024xbf16>, vector<8x1024xbf16>, vector<8x8xf32> -> vector<8x8xf32>
    %29 = tpu.iota {dimensions = array<i32: 0>} : vector<8x8xi32>
    %30 = tpu.iota {dimensions = array<i32: 1>} : vector<8x8xi32>
    %31 = arith.cmpi eq, %29, %30 : vector<8x8xi32>
    %cst_16 = arith.constant 0.000000e+00 : f32
    %32 = vector.broadcast %cst_16 : f32 to vector<8x8xf32>
    %33 = arith.select %31, %28, %32 : vector<8x8xi1>, vector<8x8xf32>
    %cst_17 = arith.constant dense<0.000000e+00> : vector<8xf32>
    %34 = vector.multi_reduction <add>, %33, %cst_17 [1] : vector<8x8xf32> to vector<8xf32>
    %35 = vector.shape_cast %34 : vector<8xf32> to vector<8x1xf32>
    %c0_18 = arith.constant 0 : index
    %c0_19 = arith.constant 0 : index
    %36 = vector.load %arg8[%c0_18, %c0_19] : memref<8x1xf32, #tpu.memory_space<vmem>>, vector<8x1xf32>
    tpu.vector_store %arg8[%c0_18, %c0_19], %35 {strides = array<i32>} : memref<8x1xf32, #tpu.memory_space<vmem>>, vector<8x1xf32>,
    %cst_20 = arith.constant dense<0xFF800000> : vector<8xf32>
    %37 = vector.multi_reduction <maximumf>, %28, %cst_20 [1] : vector<8x8xf32> to vector<8xf32>
    %38 = vector.shape_cast %37 : vector<8xf32> to vector<8x1xf32>
    %c0_21 = arith.constant 0 : index
    %c0_22 = arith.constant 0 : index
    %39 = vector.load %arg9[%c0_21, %c0_22] : memref<8x1xf32, #tpu.memory_space<vmem>>, vector<8x1xf32>
    tpu.vector_store %arg9[%c0_21, %c0_22], %38 {strides = array<i32>} : memref<8x1xf32, #tpu.memory_space<vmem>>, vector<8x1xf32>,
    %40 = vector.broadcast %38 : vector<8x1xf32> to vector<8x8xf32>
    %41 = arith.subf %28, %40 : vector<8x8xf32>
    %42 = math.exp %41 : vector<8x8xf32>
    %cst_23 = arith.constant dense<0.000000e+00> : vector<8xf32>
    %43 = vector.multi_reduction <add>, %42, %cst_23 [1] : vector<8x8xf32> to vector<8xf32>
    %44 = vector.shape_cast %43 : vector<8xf32> to vector<8x1xf32>
    %c0_24 = arith.constant 0 : index
    %c0_25 = arith.constant 0 : index
    %45 = vector.load %arg10[%c0_24, %c0_25] : memref<8x1xf32, #tpu.memory_space<vmem>>, vector<8x1xf32>
    tpu.vector_store %arg10[%c0_24, %c0_25], %44 {strides = array<i32>} : memref<8x1xf32, #tpu.memory_space<vmem>>, vector<8x1xf32>,
    return
  }
  func.func @transform_0(%arg0: i32) -> (i32, i32) {
    %c0_i32 = arith.constant 0 : i32
    %c0_i32_0 = arith.constant 0 : i32
    %c0_i32_1 = arith.constant 0 : i32
    return %c0_i32, %c0_i32_0 : i32, i32
  }
  func.func @transform_1(%arg0: i32) -> (i32, i32) {
    %c0_i32 = arith.constant 0 : i32
    %c0_i32_0 = arith.constant 0 : i32
    %c0_i32_1 = arith.constant 0 : i32
    return %c0_i32, %c0_i32_0 : i32, i32
  }
  func.func @transform_2(%arg0: i32) -> (i32, i32) {
    %c0_i32 = arith.constant 0 : i32
    %c0_i32_0 = arith.constant 0 : i32
    %c0_i32_1 = arith.constant 0 : i32
    return %c0_i32, %c0_i32_0 : i32, i32
  }
  func.func @transform_3(%arg0: i32) -> (i32, i32) {
    %c0_i32 = arith.constant 0 : i32
    %c0_i32_0 = arith.constant 0 : i32
    %c0_i32_1 = arith.constant 0 : i32
    return %c0_i32, %c0_i32_0 : i32, i32
  }
  func.func @transform_4(%arg0: i32) -> (i32, i32) {
    %c0_i32 = arith.constant 0 : i32
    %c0_i32_0 = arith.constant 0 : i32
    %c0_i32_1 = arith.constant 0 : i32
    return %c0_i32, %c0_i32_0 : i32, i32
  }
  func.func @transform_5(%arg0: i32) -> (i32, i32) {
    %c0_i32 = arith.constant 0 : i32
    %c0_i32_0 = arith.constant 0 : i32
    %c0_i32_1 = arith.constant 0 : i32
    return %c0_i32, %c0_i32_0 : i32, i32
  }
  func.func @transform_6(%arg0: i32) -> (i32, i32) {
    %c0_i32 = arith.constant 0 : i32
    %c0_i32_0 = arith.constant 0 : i32
    %c0_i32_1 = arith.constant 0 : i32
    return %c0_i32, %c0_i32_0 : i32, i32
  }
  func.func @transform_7(%arg0: i32) -> (i32, i32) {
    %c0_i32 = arith.constant 0 : i32
    %c0_i32_0 = arith.constant 0 : i32
    %c0_i32_1 = arith.constant 0 : i32
    return %c0_i32, %c0_i32_0 : i32, i32
  }
  func.func @transform_8(%arg0: i32) -> (i32, i32) {
    %c0_i32 = arith.constant 0 : i32
    %c0_i32_0 = arith.constant 0 : i32
    %c0_i32_1 = arith.constant 0 : i32
    return %c0_i32, %c0_i32_0 : i32, i32
  }
  func.func @transform_9(%arg0: i32) -> (i32, i32) {
    %c0_i32 = arith.constant 0 : i32
    %c0_i32_0 = arith.constant 0 : i32
    %c0_i32_1 = arith.constant 0 : i32
    return %c0_i32, %c0_i32_0 : i32, i32
  }
}

</mosaic_0001>

<llo_original>
// kernel: tpu_custom_call.1
$region0: #{tpu_custom_call.1}
  #allocation0 [shape = 'u32[]', space=smem, size = 0x4, offset = 0x4, fixed_abs, tag = 'smem constant byte address 0x4 - core index']
  #allocation1 [shape = 'u32[144,128]{1,0:T(1,128)}', space=vmem, size = 0x12000, scoped, tag = 'internal scratch']
  #allocation2 [shape = 'f32[1,1]{1,0:T(1,128)S(6)}', space=smem, size = 0x200, scoped, tag = 'scoped memory for tpu_custom_call.1']
  %s0 = inlined_call_operand.<no memory space> [shape: f32[1,1], index: 0, kind: input, shape index: {}]
  %s1 = inlined_call_operand.hbm [shape: f32[8,768], index: 1, kind: input, shape index: {}]
  %s2 = inlined_call_operand.hbm [shape: f32[8,1024], index: 2, kind: input, shape index: {}]
  %s3 = inlined_call_operand.hbm [shape: f32[768,1024], index: 3, kind: input, shape index: {}]
  %s4 = inlined_call_operand.hbm [shape: f32[1,1024], index: 4, kind: input, shape index: {}]
  %s5 = inlined_call_operand.hbm [shape: bf16[8,1024], index: 5, kind: output, shape index: {0}]
  %s6 = inlined_call_operand.hbm [shape: bf16[8,1024], index: 6, kind: output, shape index: {1}]
  %s7 = inlined_call_operand.vmem [shape: f32[8,1], index: 7, kind: output, shape index: {2}]
  %s8 = inlined_call_operand.vmem [shape: f32[8,1], index: 8, kind: output, shape index: {3}]
  %s9 = inlined_call_operand.vmem [shape: f32[8,1], index: 9, kind: output, shape index: {4}]
  %10 = xla_tuple %s5, %s6, %s7, %s8, %s9
  %s11 = sld [smem:[#allocation0]]
  $region78: #{tpu_custom_call.1} parent=0
    _
  %s13 = ssub.s32 1, %s11
  %s14 = scalar_select 0, %s13, %s11
  %15 = sst [smem:[#allocation2]] %s0
  $region1: #{tpu_custom_call.1} parent=0
    #allocation3 [shape = 'u8[24576]{0}', space=vmem, size = 0x6000, scoped, tag = 'input window, operand 1, single buffered']
    #allocation4 [shape = 's32[1]{0}', space=sflag, size = 0x4, scoped, tag = 'scoped memory for tpu_custom_call.1']
    #allocation5 [shape = 's32[1]{0}', space=sflag, size = 0x4, scoped, tag = 'scoped memory for tpu_custom_call.1']
    #allocation6 [shape = 'u8[32768]{0}', space=vmem, size = 0x8000, scoped, tag = 'input window, operand 2, single buffered']
    #allocation7 [shape = 's32[1]{0}', space=sflag, size = 0x4, scoped, tag = 'scoped memory for tpu_custom_call.1']
    #allocation8 [shape = 'u8[3145728]{0}', space=vmem, size = 0x300000, scoped, tag = 'input window, operand 3, single buffered']
    #allocation9 [shape = 'u8[4096]{0}', space=vmem, size = 0x1000, scoped, tag = 'input window, operand 4, single buffered']
    #allocation10 [shape = 's32[1]{0}', space=sflag, size = 0x4, scoped, tag = 'scoped memory for tpu_custom_call.1']
    #allocation11 [shape = 'u8[16384]{0}', space=vmem, size = 0x4000, scoped, tag = 'output window, operand 0, single buffered']
    #allocation12 [shape = 'u8[16384]{0}', space=vmem, size = 0x4000, scoped, tag = 'output window, operand 1, single buffered']
    #allocation13 [shape = 's32[1]{0}', space=sflag, size = 0x4, scoped, tag = 'scoped memory for tpu_custom_call.1']
    %16 = vsyncpa [#allocation4], 0
    %17 = vsyncpa [#allocation7], 0
    %18 = vsyncpa [#allocation10], 0
    %19 = vsyncpa [#allocation5], 0
    %20 = vsyncpa [#allocation13], 0
    // Predicated region
    $region2: #{tpu_custom_call.1} parent=1 // pred_check
      _
    $region3: #{tpu_custom_call.1} parent=1 // pred_check_branch
      %22 = sbr.rel (0) target = $region5
    $region4: #{tpu_custom_call.1} parent=1 // pred_region
      _
    $region5: #{tpu_custom_call.1} parent=1 // pred_fallthru
      _
    // Predicated region
    $region6: #{tpu_custom_call.1} parent=1 // pred_check
      _
    $region7: #{tpu_custom_call.1} parent=1 // pred_check_branch
      %24 = sbr.rel (0) target = $region9
    $region8: #{tpu_custom_call.1} parent=1 // pred_region
      %s26 = ssub.s32 768, 768
      %27 = vsyncadd [#allocation4], %s26
      %s29 = sshll.u32 [#allocation3], 4
      %s30 = int_to_ptr.vmem [resolvable:$true] %s29
      %32 = dma.hbm_to_vmem [thread:$0]  %s1, 768, %s30, [#allocation4]
    $region9: #{tpu_custom_call.1} parent=1 // pred_fallthru
      _
    // Predicated region
    $region10: #{tpu_custom_call.1} parent=1 // pred_check
      _
    $region11: #{tpu_custom_call.1} parent=1 // pred_check_branch
      %34 = sbr.rel (0) target = $region13
    $region12: #{tpu_custom_call.1} parent=1 // pred_region
      %s36 = ssub.s32 1024, 1024
      %37 = vsyncadd [#allocation7], %s36
      %s39 = sshll.u32 [#allocation6], 4
      %s40 = int_to_ptr.vmem [resolvable:$true] %s39
      %42 = dma.hbm_to_vmem [thread:$0]  %s2, 1024, %s40, [#allocation7]
    $region13: #{tpu_custom_call.1} parent=1 // pred_fallthru
      _
    // Predicated region
    $region14: #{tpu_custom_call.1} parent=1 // pred_check
      _
    $region15: #{tpu_custom_call.1} parent=1 // pred_check_branch
      %44 = sbr.rel (0) target = $region17
    $region16: #{tpu_custom_call.1} parent=1 // pred_region
      %s46 = ssub.s32 98304, 98304
      %47 = vsyncadd [#allocation7], %s46
      %s48 = sshll.u32 [#allocation8], 4
      %s49 = int_to_ptr.vmem [resolvable:$true] %s48
      %54 = dma.hbm_to_vmem [thread:$0]  %s3, 98304, %s49, [#allocation7], 1024, 1024, 64
    $region17: #{tpu_custom_call.1} parent=1 // pred_fallthru
      _
    // Predicated region
    $region18: #{tpu_custom_call.1} parent=1 // pred_check
      _
    $region19: #{tpu_custom_call.1} parent=1 // pred_check_branch
      %56 = sbr.rel (0) target = $region21
    $region20: #{tpu_custom_call.1} parent=1 // pred_region
      %s58 = ssub.s32 128, 128
      %59 = vsyncadd [#allocation10], %s58
      %s61 = sshll.u32 [#allocation9], 4
      %s62 = int_to_ptr.vmem [resolvable:$true] %s61
      %64 = dma.hbm_to_vmem [thread:$0]  %s4, 128, %s62, [#allocation10]
    $region21: #{tpu_custom_call.1} parent=1 // pred_fallthru
      _
    // Predicated region
    $region22: #{tpu_custom_call.1} parent=1 // pred_check
      _
    $region23: #{tpu_custom_call.1} parent=1 // pred_check_branch
      %66 = sbr.rel (0) target = $region25
    $region24: #{tpu_custom_call.1} parent=1 // pred_region
      %67 = dma.done [#allocation4], 768
    $region25: #{tpu_custom_call.1} parent=1 // pred_fallthru
      _
    // Predicated region
    $region26: #{tpu_custom_call.1} parent=1 // pred_check
      _
    $region27: #{tpu_custom_call.1} parent=1 // pred_check_branch
      %69 = sbr.rel (0) target = $region29
    $region28: #{tpu_custom_call.1} parent=1 // pred_region
      %70 = dma.done [#allocation7], 1024
    $region29: #{tpu_custom_call.1} parent=1 // pred_fallthru
      _
    // Predicated region
    $region30: #{tpu_custom_call.1} parent=1 // pred_check
      _
    $region31: #{tpu_custom_call.1} parent=1 // pred_check_branch
      %72 = sbr.rel (0) target = $region33
    $region32: #{tpu_custom_call.1} parent=1 // pred_region
      %73 = dma.done [#allocation7], 98304
    $region33: #{tpu_custom_call.1} parent=1 // pred_fallthru
      _
    // Predicated region
    $region34: #{tpu_custom_call.1} parent=1 // pred_check
      _
    $region35: #{tpu_custom_call.1} parent=1 // pred_check_branch
      %75 = sbr.rel (0) target = $region37
    $region36: #{tpu_custom_call.1} parent=1 // pred_region
      %76 = dma.done [#allocation10], 128
    $region37: #{tpu_custom_call.1} parent=1 // pred_fallthru
      _
    %s78 = sld [smem:[#allocation2]]
    %v79 = vld [vmem:[#allocation3] sm:$0xff]
    %v80 = vld [vmem:[#allocation3 + $0x8] sm:$0xff]
    %v81 = vld [vmem:[#allocation3 + $0x10] sm:$0xff]
    %v82 = vld [vmem:[#allocation3 + $0x18] sm:$0xff]
    %v83 = vld [vmem:[#allocation3 + $0x20] sm:$0xff]
    %v84 = vld [vmem:[#allocation3 + $0x28] sm:$0xff]
    %v85 = vpack.c.bf16 %v79, %v79
    %v86 = vpack.c.bf16 %v80, %v80
    %v87 = vpack.c.bf16 %v81, %v81
    %v88 = vpack.c.bf16 %v82, %v82
    %v89 = vpack.c.bf16 %v83, %v83
    %v90 = vpack.c.bf16 %v84, %v84
    %v91 = vld [vmem:[#allocation8] sm:$0xff]
    %v92 = vld [vmem:[#allocation8 + $0x8] sm:$0xff]
    %v93 = vld [vmem:[#allocation8 + $0x10] sm:$0xff]
    %v94 = vld [vmem:[#allocation8 + $0x18] sm:$0xff]
    %v95 = vld [vmem:[#allocation8 + $0x20] sm:$0xff]
    %v96 = vld [vmem:[#allocation8 + $0x28] sm:$0xff]
    %v97 = vld [vmem:[#allocation8 + $0x30] sm:$0xff]
    %v98 = vld [vmem:[#allocation8 + $0x38] sm:$0xff]
    %v99 = vld [vmem:[#allocation8 + $0x40] sm:$0xff]
    %v100 = vld [vmem:[#allocation8 + $0x48] sm:$0xff]
    %v101 = vld [vmem:[#allocation8 + $0x50] sm:$0xff]
    %v102 = vld [vmem:[#allocation8 + $0x58] sm:$0xff]
    %v103 = vld [vmem:[#allocation8 + $0x60] sm:$0xff]
    %v104 = vld [vmem:[#allocation8 + $0x68] sm:$0xff]
    %v105 = vld [vmem:[#allocation8 + $0x70] sm:$0xff]
    %v106 = vld [vmem:[#allocation8 + $0x78] sm:$0xff]
    %v107 = vld [vmem:[#allocation8 + $0x80] sm:$0xff]
    %v108 = vld [vmem:[#allocation8 + $0x88] sm:$0xff]
    %v109 = vld [vmem:[#allocation8 + $0x90] sm:$0xff]
    %v110 = vld [vmem:[#allocation8 + $0x98] sm:$0xff]
    %v111 = vld [vmem:[#allocation8 + $0xa0] sm:$0xff]
    %v112 = vld [vmem:[#allocation8 + $0xa8] sm:$0xff]
    %v113 = vld [vmem:[#allocation8 + $0xb0] sm:$0xff]
    %v114 = vld [vmem:[#allocation8 + $0xb8] sm:$0xff]
    %v115 = vld [vmem:[#allocation8 + $0xc0] sm:$0xff]
    %v116 = vld [vmem:[#allocation8 + $0xc8] sm:$0xff]
    %v117 = vld [vmem:[#allocation8 + $0xd0] sm:$0xff]
    %v118 = vld [vmem:[#allocation8 + $0xd8] sm:$0xff]
    %v119 = vld [vmem:[#allocation8 + $0xe0] sm:$0xff]
    %v120 = vld [vmem:[#allocation8 + $0xe8] sm:$0xff]
    %v121 = vld [vmem:[#allocation8 + $0xf0] sm:$0xff]
    %v122 = vld [vmem:[#allocation8 + $0xf8] sm:$0xff]
    %v123 = vld [vmem:[#allocation8 + $0x100] sm:$0xff]
    %v124 = vld [vmem:[#allocation8 + $0x108] sm:$0xff]
    %v125 = vld [vmem:[#allocation8 + $0x110] sm:$0xff]
    %v126 = vld [vmem:[#allocation8 + $0x118] sm:$0xff]
    %v127 = vld [vmem:[#allocation8 + $0x120] sm:$0xff]
    %v128 = vld [vmem:[#allocation8 + $0x128] sm:$0xff]
    %v129 = vld [vmem:[#allocation8 + $0x130] sm:$0xff]
    %v130 = vld [vmem:[#allocation8 + $0x138] sm:$0xff]
    %v131 = vld [vmem:[#allocation8 + $0x140] sm:$0xff]
    %v132 = vld [vmem:[#allocation8 + $0x148] sm:$0xff]
    %v133 = vld [vmem:[#allocation8 + $0x150] sm:$0xff]
    %v134 = vld [vmem:[#allocation8 + $0x158] sm:$0xff]
    %v135 = vld [vmem:[#allocation8 + $0x160] sm:$0xff]
    %v136 = vld [vmem:[#allocation8 + $0x168] sm:$0xff]
    %v137 = vld [vmem:[#allocation8 + $0x170] sm:$0xff]
    %v138 = vld [vmem:[#allocation8 + $0x178] sm:$0xff]
    %v139 = vld [vmem:[#allocation8 + $0x180] sm:$0xff]
    %v140 = vld [vmem:[#allocation8 + $0x188] sm:$0xff]
    %v141 = vld [vmem:[#allocation8 + $0x190] sm:$0xff]
    %v142 = vld [vmem:[#allocation8 + $0x198] sm:$0xff]
    %v143 = vld [vmem:[#allocation8 + $0x1a0] sm:$0xff]
    %v144 = vld [vmem:[#allocation8 + $0x1a8] sm:$0xff]
    %v145 = vld [vmem:[#allocation8 + $0x1b0] sm:$0xff]
    %v146 = vld [vmem:[#allocation8 + $0x1b8] sm:$0xff]
    %v147 = vld [vmem:[#allocation8 + $0x1c0] sm:$0xff]
    %v148 = vld [vmem:[#allocation8 + $0x1c8] sm:$0xff]
    %v149 = vld [vmem:[#allocation8 + $0x1d0] sm:$0xff]
    %v150 = vld [vmem:[#allocation8 + $0x1d8] sm:$0xff]
    %v151 = vld [vmem:[#allocation8 + $0x1e0] sm:$0xff]
    %v152 = vld [vmem:[#allocation8 + $0x1e8] sm:$0xff]
    %v153 = vld [vmem:[#allocation8 + $0x1f0] sm:$0xff]
    %v154 = vld [vmem:[#allocation8 + $0x1f8] sm:$0xff]
    %v155 = vld [vmem:[#allocation8 + $0x200] sm:$0xff]
    %v156 = vld [vmem:[#allocation8 + $0x208] sm:$0xff]
    %v157 = vld [vmem:[#allocation8 + $0x210] sm:$0xff]
    %v158 = vld [vmem:[#allocation8 + $0x218] sm:$0xff]
    %v159 = vld [vmem:[#allocation8 + $0x220] sm:$0xff]
    %v160 = vld [vmem:[#allocation8 + $0x228] sm:$0xff]
    %v161 = vld [vmem:[#allocation8 + $0x230] sm:$0xff]
    %v162 = vld [vmem:[#allocation8 + $0x238] sm:$0xff]
    %v163 = vld [vmem:[#allocation8 + $0x240] sm:$0xff]
    %v164 = vld [vmem:[#allocation8 + $0x248] sm:$0xff]
    %v165 = vld [vmem:[#allocation8 + $0x250] sm:$0xff]
    %v166 = vld [vmem:[#allocation8 + $0x258] sm:$0xff]
    %v167 = vld [vmem:[#allocation8 + $0x260] sm:$0xff]
    %v168 = vld [vmem:[#allocation8 + $0x268] sm:$0xff]
    %v169 = vld [vmem:[#allocation8 + $0x270] sm:$0xff]
    %v170 = vld [vmem:[#allocation8 + $0x278] sm:$0xff]
    %v171 = vld [vmem:[#allocation8 + $0x280] sm:$0xff]
    %v172 = vld [vmem:[#allocation8 + $0x288] sm:$0xff]
    %v173 = vld [vmem:[#allocation8 + $0x290] sm:$0xff]
    %v174 = vld [vmem:[#allocation8 + $0x298] sm:$0xff]
    %v175 = vld [vmem:[#allocation8 + $0x2a0] sm:$0xff]
    %v176 = vld [vmem:[#allocation8 + $0x2a8] sm:$0xff]
    %v177 = vld [vmem:[#allocation8 + $0x2b0] sm:$0xff]
    %v178 = vld [vmem:[#allocation8 + $0x2b8] sm:$0xff]
    %v179 = vld [vmem:[#allocation8 + $0x2c0] sm:$0xff]
    %v180 = vld [vmem:[#allocation8 + $0x2c8] sm:$0xff]
    %v181 = vld [vmem:[#allocation8 + $0x2d0] sm:$0xff]
    %v182 = vld [vmem:[#allocation8 + $0x2d8] sm:$0xff]
    %v183 = vld [vmem:[#allocation8 + $0x2e0] sm:$0xff]
    %v184 = vld [vmem:[#allocation8 + $0x2e8] sm:$0xff]
    %v185 = vld [vmem:[#allocation8 + $0x2f0] sm:$0xff]
    %v186 = vld [vmem:[#allocation8 + $0x2f8] sm:$0xff]
    %v187 = vld [vmem:[#allocation8 + $0x300] sm:$0xff]
    %v188 = vld [vmem:[#allocation8 + $0x308] sm:$0xff]
    %v189 = vld [vmem:[#allocation8 + $0x310] sm:$0xff]
    %v190 = vld [vmem:[#allocation8 + $0x318] sm:$0xff]
    %v191 = vld [vmem:[#allocation8 + $0x320] sm:$0xff]
    %v192 = vld [vmem:[#allocation8 + $0x328] sm:$0xff]
    %v193 = vld [vmem:[#allocation8 + $0x330] sm:$0xff]
    %v194 = vld [vmem:[#allocation8 + $0x338] sm:$0xff]
    %v195 = vld [vmem:[#allocation8 + $0x340] sm:$0xff]
    %v196 = vld [vmem:[#allocation8 + $0x348] sm:$0xff]
    %v197 = vld [vmem:[#allocation8 + $0x350] sm:$0xff]
    %v198 = vld [vmem:[#allocation8 + $0x358] sm:$0xff]
    %v199 = vld [vmem:[#allocation8 + $0x360] sm:$0xff]
    %v200 = vld [vmem:[#allocation8 + $0x368] sm:$0xff]
    %v201 = vld [vmem:[#allocation8 + $0x370] sm:$0xff]
    %v202 = vld [vmem:[#allocation8 + $0x378] sm:$0xff]
    %v203 = vld [vmem:[#allocation8 + $0x380] sm:$0xff]
    %v204 = vld [vmem:[#allocation8 + $0x388] sm:$0xff]
    %v205 = vld [vmem:[#allocation8 + $0x390] sm:$0xff]
    %v206 = vld [vmem:[#allocation8 + $0x398] sm:$0xff]
    %v207 = vld [vmem:[#allocation8 + $0x3a0] sm:$0xff]
    %v208 = vld [vmem:[#allocation8 + $0x3a8] sm:$0xff]
    %v209 = vld [vmem:[#allocation8 + $0x3b0] sm:$0xff]
    %v210 = vld [vmem:[#allocation8 + $0x3b8] sm:$0xff]
    %v211 = vld [vmem:[#allocation8 + $0x3c0] sm:$0xff]
    %v212 = vld [vmem:[#allocation8 + $0x3c8] sm:$0xff]
    %v213 = vld [vmem:[#allocation8 + $0x3d0] sm:$0xff]
    %v214 = vld [vmem:[#allocation8 + $0x3d8] sm:$0xff]
    %v215 = vld [vmem:[#allocation8 + $0x3e0] sm:$0xff]
    %v216 = vld [vmem:[#allocation8 + $0x3e8] sm:$0xff]
    %v217 = vld [vmem:[#allocation8 + $0x3f0] sm:$0xff]
    %v218 = vld [vmem:[#allocation8 + $0x3f8] sm:$0xff]
    %v219 = vld [vmem:[#allocation8 + $0x400] sm:$0xff]
    %v220 = vld [vmem:[#allocation8 + $0x408] sm:$0xff]
    %v221 = vld [vmem:[#allocation8 + $0x410] sm:$0xff]
    %v222 = vld [vmem:[#allocation8 + $0x418] sm:$0xff]
    %v223 = vld [vmem:[#allocation8 + $0x420] sm:$0xff]
    %v224 = vld [vmem:[#allocation8 + $0x428] sm:$0xff]
    %v225 = vld [vmem:[#allocation8 + $0x430] sm:$0xff]
    %v226 = vld [vmem:[#allocation8 + $0x438] sm:$0xff]
    %v227 = vld [vmem:[#allocation8 + $0x440] sm:$0xff]
    %v228 = vld [vmem:[#allocation8 + $0x448] sm:$0xff]
    %v229 = vld [vmem:[#allocation8 + $0x450] sm:$0xff]
    %v230 = vld [vmem:[#allocation8 + $0x458] sm:$0xff]
    %v231 = vld [vmem:[#allocation8 + $0x460] sm:$0xff]
    %v232 = vld [vmem:[#allocation8 + $0x468] sm:$0xff]
    %v233 = vld [vmem:[#allocation8 + $0x470] sm:$0xff]
    %v234 = vld [vmem:[#allocation8 + $0x478] sm:$0xff]
    %v235 = vld [vmem:[#allocation8 + $0x480] sm:$0xff]
    %v236 = vld [vmem:[#allocation8 + $0x488] sm:$0xff]
    %v237 = vld [vmem:[#allocation8 + $0x490] sm:$0xff]
    %v238 = vld [vmem:[#allocation8 + $0x498] sm:$0xff]
    %v239 = vld [vmem:[#allocation8 + $0x4a0] sm:$0xff]
    %v240 = vld [vmem:[#allocation8 + $0x4a8] sm:$0xff]
    %v241 = vld [vmem:[#allocation8 + $0x4b0] sm:$0xff]
    %v242 = vld [vmem:[#allocation8 + $0x4b8] sm:$0xff]
    %v243 = vld [vmem:[#allocation8 + $0x4c0] sm:$0xff]
    %v244 = vld [vmem:[#allocation8 + $0x4c8] sm:$0xff]
    %v245 = vld [vmem:[#allocation8 + $0x4d0] sm:$0xff]
    %v246 = vld [vmem:[#allocation8 + $0x4d8] sm:$0xff]
    %v247 = vld [vmem:[#allocation8 + $0x4e0] sm:$0xff]
    %v248 = vld [vmem:[#allocation8 + $0x4e8] sm:$0xff]
    %v249 = vld [vmem:[#allocation8 + $0x4f0] sm:$0xff]
    %v250 = vld [vmem:[#allocation8 + $0x4f8] sm:$0xff]
    %v251 = vld [vmem:[#allocation8 + $0x500] sm:$0xff]
    %v252 = vld [vmem:[#allocation8 + $0x508] sm:$0xff]
    %v253 = vld [vmem:[#allocation8 + $0x510] sm:$0xff]
    %v254 = vld [vmem:[#allocation8 + $0x518] sm:$0xff]
    %v255 = vld [vmem:[#allocation8 + $0x520] sm:$0xff]
    %v256 = vld [vmem:[#allocation8 + $0x528] sm:$0xff]
    %v257 = vld [vmem:[#allocation8 + $0x530] sm:$0xff]
    %v258 = vld [vmem:[#allocation8 + $0x538] sm:$0xff]
    %v259 = vld [vmem:[#allocation8 + $0x540] sm:$0xff]
    %v260 = vld [vmem:[#allocation8 + $0x548] sm:$0xff]
    %v261 = vld [vmem:[#allocation8 + $0x550] sm:$0xff]
    %v262 = vld [vmem:[#allocation8 + $0x558] sm:$0xff]
    %v263 = vld [vmem:[#allocation8 + $0x560] sm:$0xff]
    %v264 = vld [vmem:[#allocation8 + $0x568] sm:$0xff]
    %v265 = vld [vmem:[#allocation8 + $0x570] sm:$0xff]
    %v266 = vld [vmem:[#allocation8 + $0x578] sm:$0xff]
    %v267 = vld [vmem:[#allocation8 + $0x580] sm:$0xff]
    %v268 = vld [vmem:[#allocation8 + $0x588] sm:$0xff]
    %v269 = vld [vmem:[#allocation8 + $0x590] sm:$0xff]
    %v270 = vld [vmem:[#allocation8 + $0x598] sm:$0xff]
    %v271 = vld [vmem:[#allocation8 + $0x5a0] sm:$0xff]
    %v272 = vld [vmem:[#allocation8 + $0x5a8] sm:$0xff]
    %v273 = vld [vmem:[#allocation8 + $0x5b0] sm:$0xff]
    %v274 = vld [vmem:[#allocation8 + $0x5b8] sm:$0xff]
    %v275 = vld [vmem:[#allocation8 + $0x5c0] sm:$0xff]
    %v276 = vld [vmem:[#allocation8 + $0x5c8] sm:$0xff]
    %v277 = vld [vmem:[#allocation8 + $0x5d0] sm:$0xff]
    %v278 = vld [vmem:[#allocation8 + $0x5d8] sm:$0xff]
    %v279 = vld [vmem:[#allocation8 + $0x5e0] sm:$0xff]
    %v280 = vld [vmem:[#allocation8 + $0x5e8] sm:$0xff]
    %v281 = vld [vmem:[#allocation8 + $0x5f0] sm:$0xff]
    %v282 = vld [vmem:[#allocation8 + $0x5f8] sm:$0xff]
    %v283 = vld [vmem:[#allocation8 + $0x600] sm:$0xff]
    %v284 = vld [vmem:[#allocation8 + $0x608] sm:$0xff]
    %v285 = vld [vmem:[#allocation8 + $0x610] sm:$0xff]
    %v286 = vld [vmem:[#allocation8 + $0x618] sm:$0xff]
    %v287 = vld [vmem:[#allocation8 + $0x620] sm:$0xff]
    %v288 = vld [vmem:[#allocation8 + $0x628] sm:$0xff]
    %v289 = vld [vmem:[#allocation8 + $0x630] sm:$0xff]
    %v290 = vld [vmem:[#allocation8 + $0x638] sm:$0xff]
    %v291 = vld [vmem:[#allocation8 + $0x640] sm:$0xff]
    %v292 = vld [vmem:[#allocation8 + $0x648] sm:$0xff]
    %v293 = vld [vmem:[#allocation8 + $0x650] sm:$0xff]
    %v294 = vld [vmem:[#allocation8 + $0x658] sm:$0xff]
    %v295 = vld [vmem:[#allocation8 + $0x660] sm:$0xff]
    %v296 = vld [vmem:[#allocation8 + $0x668] sm:$0xff]
    %v297 = vld [vmem:[#allocation8 + $0x670] sm:$0xff]
    %v298 = vld [vmem:[#allocation8 + $0x678] sm:$0xff]
    %v299 = vld [vmem:[#allocation8 + $0x680] sm:$0xff]
    %v300 = vld [vmem:[#allocation8 + $0x688] sm:$0xff]
    %v301 = vld [vmem:[#allocation8 + $0x690] sm:$0xff]
    %v302 = vld [vmem:[#allocation8 + $0x698] sm:$0xff]
    %v303 = vld [vmem:[#allocation8 + $0x6a0] sm:$0xff]
    %v304 = vld [vmem:[#allocation8 + $0x6a8] sm:$0xff]
    %v305 = vld [vmem:[#allocation8 + $0x6b0] sm:$0xff]
    %v306 = vld [vmem:[#allocation8 + $0x6b8] sm:$0xff]
    %v307 = vld [vmem:[#allocation8 + $0x6c0] sm:$0xff]
    %v308 = vld [vmem:[#allocation8 + $0x6c8] sm:$0xff]
    %v309 = vld [vmem:[#allocation8 + $0x6d0] sm:$0xff]
    %v310 = vld [vmem:[#allocation8 + $0x6d8] sm:$0xff]
    %v311 = vld [vmem:[#allocation8 + $0x6e0] sm:$0xff]
    %v312 = vld [vmem:[#allocation8 + $0x6e8] sm:$0xff]
    %v313 = vld [vmem:[#allocation8 + $0x6f0] sm:$0xff]
    %v314 = vld [vmem:[#allocation8 + $0x6f8] sm:$0xff]
    %v315 = vld [vmem:[#allocation8 + $0x700] sm:$0xff]
    %v316 = vld [vmem:[#allocation8 + $0x708] sm:$0xff]
    %v317 = vld [vmem:[#allocation8 + $0x710] sm:$0xff]
    %v318 = vld [vmem:[#allocation8 + $0x718] sm:$0xff]
    %v319 = vld [vmem:[#allocation8 + $0x720] sm:$0xff]
    %v320 = vld [vmem:[#allocation8 + $0x728] sm:$0xff]
    %v321 = vld [vmem:[#allocation8 + $0x730] sm:$0xff]
    %v322 = vld [vmem:[#allocation8 + $0x738] sm:$0xff]
    %v323 = vld [vmem:[#allocation8 + $0x740] sm:$0xff]
    %v324 = vld [vmem:[#allocation8 + $0x748] sm:$0xff]
    %v325 = vld [vmem:[#allocation8 + $0x750] sm:$0xff]
    %v326 = vld [vmem:[#allocation8 + $0x758] sm:$0xff]
    %v327 = vld [vmem:[#allocation8 + $0x760] sm:$0xff]
    %v328 = vld [vmem:[#allocation8 + $0x768] sm:$0xff]
    %v329 = vld [vmem:[#allocation8 + $0x770] sm:$0xff]
    %v330 = vld [vmem:[#allocation8 + $0x778] sm:$0xff]
    %v331 = vld [vmem:[#allocation8 + $0x780] sm:$0xff]
    %v332 = vld [vmem:[#allocation8 + $0x788] sm:$0xff]
    %v333 = vld [vmem:[#allocation8 + $0x790] sm:$0xff]
    %v334 = vld [vmem:[#allocation8 + $0x798] sm:$0xff]
    %v335 = vld [vmem:[#allocation8 + $0x7a0] sm:$0xff]
    %v336 = vld [vmem:[#allocation8 + $0x7a8] sm:$0xff]
    %v337 = vld [vmem:[#allocation8 + $0x7b0] sm:$0xff]
    %v338 = vld [vmem:[#allocation8 + $0x7b8] sm:$0xff]
    %v339 = vld [vmem:[#allocation8 + $0x7c0] sm:$0xff]
    %v340 = vld [vmem:[#allocation8 + $0x7c8] sm:$0xff]
    %v341 = vld [vmem:[#allocation8 + $0x7d0] sm:$0xff]
    %v342 = vld [vmem:[#allocation8 + $0x7d8] sm:$0xff]
    %v343 = vld [vmem:[#allocation8 + $0x7e0] sm:$0xff]
    %v344 = vld [vmem:[#allocation8 + $0x7e8] sm:$0xff]
    %v345 = vld [vmem:[#allocation8 + $0x7f0] sm:$0xff]
    %v346 = vld [vmem:[#allocation8 + $0x7f8] sm:$0xff]
    %v347 = vld [vmem:[#allocation8 + $0x800] sm:$0xff]
    %v348 = vld [vmem:[#allocation8 + $0x808] sm:$0xff]
    %v349 = vld [vmem:[#allocation8 + $0x810] sm:$0xff]
    %v350 = vld [vmem:[#allocation8 + $0x818] sm:$0xff]
    %v351 = vld [vmem:[#allocation8 + $0x820] sm:$0xff]
    %v352 = vld [vmem:[#allocation8 + $0x828] sm:$0xff]
    %v353 = vld [vmem:[#allocation8 + $0x830] sm:$0xff]
    %v354 = vld [vmem:[#allocation8 + $0x838] sm:$0xff]
    %v355 = vld [vmem:[#allocation8 + $0x840] sm:$0xff]
    %v356 = vld [vmem:[#allocation8 + $0x848] sm:$0xff]
    %v357 = vld [vmem:[#allocation8 + $0x850] sm:$0xff]
    %v358 = vld [vmem:[#allocation8 + $0x858] sm:$0xff]
    %v359 = vld [vmem:[#allocation8 + $0x860] sm:$0xff]
    %v360 = vld [vmem:[#allocation8 + $0x868] sm:$0xff]
    %v361 = vld [vmem:[#allocation8 + $0x870] sm:$0xff]
    %v362 = vld [vmem:[#allocation8 + $0x878] sm:$0xff]
    %v363 = vld [vmem:[#allocation8 + $0x880] sm:$0xff]
    %v364 = vld [vmem:[#allocation8 + $0x888] sm:$0xff]
    %v365 = vld [vmem:[#allocation8 + $0x890] sm:$0xff]
    %v366 = vld [vmem:[#allocation8 + $0x898] sm:$0xff]
    %v367 = vld [vmem:[#allocation8 + $0x8a0] sm:$0xff]
    %v368 = vld [vmem:[#allocation8 + $0x8a8] sm:$0xff]
    %v369 = vld [vmem:[#allocation8 + $0x8b0] sm:$0xff]
    %v370 = vld [vmem:[#allocation8 + $0x8b8] sm:$0xff]
    %v371 = vld [vmem:[#allocation8 + $0x8c0] sm:$0xff]
    %v372 = vld [vmem:[#allocation8 + $0x8c8] sm:$0xff]
    %v373 = vld [vmem:[#allocation8 + $0x8d0] sm:$0xff]
    %v374 = vld [vmem:[#allocation8 + $0x8d8] sm:$0xff]
    %v375 = vld [vmem:[#allocation8 + $0x8e0] sm:$0xff]
    %v376 = vld [vmem:[#allocation8 + $0x8e8] sm:$0xff]
    %v377 = vld [vmem:[#allocation8 + $0x8f0] sm:$0xff]
    %v378 = vld [vmem:[#allocation8 + $0x8f8] sm:$0xff]
    %v379 = vld [vmem:[#allocation8 + $0x900] sm:$0xff]
    %v380 = vld [vmem:[#allocation8 + $0x908] sm:$0xff]
    %v381 = vld [vmem:[#allocation8 + $0x910] sm:$0xff]
    %v382 = vld [vmem:[#allocation8 + $0x918] sm:$0xff]
    %v383 = vld [vmem:[#allocation8 + $0x920] sm:$0xff]
    %v384 = vld [vmem:[#allocation8 + $0x928] sm:$0xff]
    %v385 = vld [vmem:[#allocation8 + $0x930] sm:$0xff]
    %v386 = vld [vmem:[#allocation8 + $0x938] sm:$0xff]
    %v387 = vld [vmem:[#allocation8 + $0x940] sm:$0xff]
    %v388 = vld [vmem:[#allocation8 + $0x948] sm:$0xff]
    %v389 = vld [vmem:[#allocation8 + $0x950] sm:$0xff]
    %v390 = vld [vmem:[#allocation8 + $0x958] sm:$0xff]
    %v391 = vld [vmem:[#allocation8 + $0x960] sm:$0xff]
    %v392 = vld [vmem:[#allocation8 + $0x968] sm:$0xff]
    %v393 = vld [vmem:[#allocation8 + $0x970] sm:$0xff]
    %v394 = vld [vmem:[#allocation8 + $0x978] sm:$0xff]
    %v395 = vld [vmem:[#allocation8 + $0x980] sm:$0xff]
    %v396 = vld [vmem:[#allocation8 + $0x988] sm:$0xff]
    %v397 = vld [vmem:[#allocation8 + $0x990] sm:$0xff]
    %v398 = vld [vmem:[#allocation8 + $0x998] sm:$0xff]
    %v399 = vld [vmem:[#allocation8 + $0x9a0] sm:$0xff]
    %v400 = vld [vmem:[#allocation8 + $0x9a8] sm:$0xff]
    %v401 = vld [vmem:[#allocation8 + $0x9b0] sm:$0xff]
    %v402 = vld [vmem:[#allocation8 + $0x9b8] sm:$0xff]
    %v403 = vld [vmem:[#allocation8 + $0x9c0] sm:$0xff]
    %v404 = vld [vmem:[#allocation8 + $0x9c8] sm:$0xff]
    %v405 = vld [vmem:[#allocation8 + $0x9d0] sm:$0xff]
    %v406 = vld [vmem:[#allocation8 + $0x9d8] sm:$0xff]
    %v407 = vld [vmem:[#allocation8 + $0x9e0] sm:$0xff]
    %v408 = vld [vmem:[#allocation8 + $0x9e8] sm:$0xff]
    %v409 = vld [vmem:[#allocation8 + $0x9f0] sm:$0xff]
    %v410 = vld [vmem:[#allocation8 + $0x9f8] sm:$0xff]
    %v411 = vld [vmem:[#allocation8 + $0xa00] sm:$0xff]
    %v412 = vld [vmem:[#allocation8 + $0xa08] sm:$0xff]
    %v413 = vld [vmem:[#allocation8 + $0xa10] sm:$0xff]
    %v414 = vld [vmem:[#allocation8 + $0xa18] sm:$0xff]
    %v415 = vld [vmem:[#allocation8 + $0xa20] sm:$0xff]
    %v416 = vld [vmem:[#allocation8 + $0xa28] sm:$0xff]
    %v417 = vld [vmem:[#allocation8 + $0xa30] sm:$0xff]
    %v418 = vld [vmem:[#allocation8 + $0xa38] sm:$0xff]
    %v419 = vld [vmem:[#allocation8 + $0xa40] sm:$0xff]
    %v420 = vld [vmem:[#allocation8 + $0xa48] sm:$0xff]
    %v421 = vld [vmem:[#allocation8 + $0xa50] sm:$0xff]
    %v422 = vld [vmem:[#allocation8 + $0xa58] sm:$0xff]
    %v423 = vld [vmem:[#allocation8 + $0xa60] sm:$0xff]
    %v424 = vld [vmem:[#allocation8 + $0xa68] sm:$0xff]
    %v425 = vld [vmem:[#allocation8 + $0xa70] sm:$0xff]
    %v426 = vld [vmem:[#allocation8 + $0xa78] sm:$0xff]
    %v427 = vld [vmem:[#allocation8 + $0xa80] sm:$0xff]
    %v428 = vld [vmem:[#allocation8 + $0xa88] sm:$0xff]
    %v429 = vld [vmem:[#allocation8 + $0xa90] sm:$0xff]
    %v430 = vld [vmem:[#allocation8 + $0xa98] sm:$0xff]
    %v431 = vld [vmem:[#allocation8 + $0xaa0] sm:$0xff]
    %v432 = vld [vmem:[#allocation8 + $0xaa8] sm:$0xff]
    %v433 = vld [vmem:[#allocation8 + $0xab0] sm:$0xff]
    %v434 = vld [vmem:[#allocation8 + $0xab8] sm:$0xff]
    %v435 = vld [vmem:[#allocation8 + $0xac0] sm:$0xff]
    %v436 = vld [vmem:[#allocation8 + $0xac8] sm:$0xff]
    %v437 = vld [vmem:[#allocation8 + $0xad0] sm:$0xff]
    %v438 = vld [vmem:[#allocation8 + $0xad8] sm:$0xff]
    %v439 = vld [vmem:[#allocation8 + $0xae0] sm:$0xff]
    %v440 = vld [vmem:[#allocation8 + $0xae8] sm:$0xff]
    %v441 = vld [vmem:[#allocation8 + $0xaf0] sm:$0xff]
    %v442 = vld [vmem:[#allocation8 + $0xaf8] sm:$0xff]
    %v443 = vld [vmem:[#allocation8 + $0xb00] sm:$0xff]
    %v444 = vld [vmem:[#allocation8 + $0xb08] sm:$0xff]
    %v445 = vld [vmem:[#allocation8 + $0xb10] sm:$0xff]
    %v446 = vld [vmem:[#allocation8 + $0xb18] sm:$0xff]
    %v447 = vld [vmem:[#allocation8 + $0xb20] sm:$0xff]
    %v448 = vld [vmem:[#allocation8 + $0xb28] sm:$0xff]
    %v449 = vld [vmem:[#allocation8 + $0xb30] sm:$0xff]
    %v450 = vld [vmem:[#allocation8 + $0xb38] sm:$0xff]
    %v451 = vld [vmem:[#allocation8 + $0xb40] sm:$0xff]
    %v452 = vld [vmem:[#allocation8 + $0xb48] sm:$0xff]
    %v453 = vld [vmem:[#allocation8 + $0xb50] sm:$0xff]
    %v454 = vld [vmem:[#allocation8 + $0xb58] sm:$0xff]
    %v455 = vld [vmem:[#allocation8 + $0xb60] sm:$0xff]
    %v456 = vld [vmem:[#allocation8 + $0xb68] sm:$0xff]
    %v457 = vld [vmem:[#allocation8 + $0xb70] sm:$0xff]
    %v458 = vld [vmem:[#allocation8 + $0xb78] sm:$0xff]
    %v459 = vld [vmem:[#allocation8 + $0xb80] sm:$0xff]
    %v460 = vld [vmem:[#allocation8 + $0xb88] sm:$0xff]
    %v461 = vld [vmem:[#allocation8 + $0xb90] sm:$0xff]
    %v462 = vld [vmem:[#allocation8 + $0xb98] sm:$0xff]
    %v463 = vld [vmem:[#allocation8 + $0xba0] sm:$0xff]
    %v464 = vld [vmem:[#allocation8 + $0xba8] sm:$0xff]
    %v465 = vld [vmem:[#allocation8 + $0xbb0] sm:$0xff]
    %v466 = vld [vmem:[#allocation8 + $0xbb8] sm:$0xff]
    %v467 = vld [vmem:[#allocation8 + $0xbc0] sm:$0xff]
    %v468 = vld [vmem:[#allocation8 + $0xbc8] sm:$0xff]
    %v469 = vld [vmem:[#allocation8 + $0xbd0] sm:$0xff]
    %v470 = vld [vmem:[#allocation8 + $0xbd8] sm:$0xff]
    %v471 = vld [vmem:[#allocation8 + $0xbe0] sm:$0xff]
    %v472 = vld [vmem:[#allocation8 + $0xbe8] sm:$0xff]
    %v473 = vld [vmem:[#allocation8 + $0xbf0] sm:$0xff]
    %v474 = vld [vmem:[#allocation8 + $0xbf8] sm:$0xff]
    %v475 = vld [vmem:[#allocation8 + $0xc00] sm:$0xff]
    %v476 = vld [vmem:[#allocation8 + $0xc08] sm:$0xff]
    %v477 = vld [vmem:[#allocation8 + $0xc10] sm:$0xff]
    %v478 = vld [vmem:[#allocation8 + $0xc18] sm:$0xff]
    %v479 = vld [vmem:[#allocation8 + $0xc20] sm:$0xff]
    %v480 = vld [vmem:[#allocation8 + $0xc28] sm:$0xff]
    %v481 = vld [vmem:[#allocation8 + $0xc30] sm:$0xff]
    %v482 = vld [vmem:[#allocation8 + $0xc38] sm:$0xff]
    %v483 = vld [vmem:[#allocation8 + $0xc40] sm:$0xff]
    %v484 = vld [vmem:[#allocation8 + $0xc48] sm:$0xff]
    %v485 = vld [vmem:[#allocation8 + $0xc50] sm:$0xff]
    %v486 = vld [vmem:[#allocation8 + $0xc58] sm:$0xff]
    %v487 = vld [vmem:[#allocation8 + $0xc60] sm:$0xff]
    %v488 = vld [vmem:[#allocation8 + $0xc68] sm:$0xff]
    %v489 = vld [vmem:[#allocation8 + $0xc70] sm:$0xff]
    %v490 = vld [vmem:[#allocation8 + $0xc78] sm:$0xff]
    %v491 = vld [vmem:[#allocation8 + $0xc80] sm:$0xff]
    %v492 = vld [vmem:[#allocation8 + $0xc88] sm:$0xff]
    %v493 = vld [vmem:[#allocation8 + $0xc90] sm:$0xff]
    %v494 = vld [vmem:[#allocation8 + $0xc98] sm:$0xff]
    %v495 = vld [vmem:[#allocation8 + $0xca0] sm:$0xff]
    %v496 = vld [vmem:[#allocation8 + $0xca8] sm:$0xff]
    %v497 = vld [vmem:[#allocation8 + $0xcb0] sm:$0xff]
    %v498 = vld [vmem:[#allocation8 + $0xcb8] sm:$0xff]
    %v499 = vld [vmem:[#allocation8 + $0xcc0] sm:$0xff]
    %v500 = vld [vmem:[#allocation8 + $0xcc8] sm:$0xff]
    %v501 = vld [vmem:[#allocation8 + $0xcd0] sm:$0xff]
    %v502 = vld [vmem:[#allocation8 + $0xcd8] sm:$0xff]
    %v503 = vld [vmem:[#allocation8 + $0xce0] sm:$0xff]
    %v504 = vld [vmem:[#allocation8 + $0xce8] sm:$0xff]
    %v505 = vld [vmem:[#allocation8 + $0xcf0] sm:$0xff]
    %v506 = vld [vmem:[#allocation8 + $0xcf8] sm:$0xff]
    %v507 = vld [vmem:[#allocation8 + $0xd00] sm:$0xff]
    %v508 = vld [vmem:[#allocation8 + $0xd08] sm:$0xff]
    %v509 = vld [vmem:[#allocation8 + $0xd10] sm:$0xff]
    %v510 = vld [vmem:[#allocation8 + $0xd18] sm:$0xff]
    %v511 = vld [vmem:[#allocation8 + $0xd20] sm:$0xff]
    %v512 = vld [vmem:[#allocation8 + $0xd28] sm:$0xff]
    %v513 = vld [vmem:[#allocation8 + $0xd30] sm:$0xff]
    %v514 = vld [vmem:[#allocation8 + $0xd38] sm:$0xff]
    %v515 = vld [vmem:[#allocation8 + $0xd40] sm:$0xff]
    %v516 = vld [vmem:[#allocation8 + $0xd48] sm:$0xff]
    %v517 = vld [vmem:[#allocation8 + $0xd50] sm:$0xff]
    %v518 = vld [vmem:[#allocation8 + $0xd58] sm:$0xff]
    %v519 = vld [vmem:[#allocation8 + $0xd60] sm:$0xff]
    %v520 = vld [vmem:[#allocation8 + $0xd68] sm:$0xff]
    %v521 = vld [vmem:[#allocation8 + $0xd70] sm:$0xff]
    %v522 = vld [vmem:[#allocation8 + $0xd78] sm:$0xff]
    %v523 = vld [vmem:[#allocation8 + $0xd80] sm:$0xff]
    %v524 = vld [vmem:[#allocation8 + $0xd88] sm:$0xff]
    %v525 = vld [vmem:[#allocation8 + $0xd90] sm:$0xff]
    %v526 = vld [vmem:[#allocation8 + $0xd98] sm:$0xff]
    %v527 = vld [vmem:[#allocation8 + $0xda0] sm:$0xff]
    %v528 = vld [vmem:[#allocation8 + $0xda8] sm:$0xff]
    %v529 = vld [vmem:[#allocation8 + $0xdb0] sm:$0xff]
    %v530 = vld [vmem:[#allocation8 + $0xdb8] sm:$0xff]
    %v531 = vld [vmem:[#allocation8 + $0xdc0] sm:$0xff]
    %v532 = vld [vmem:[#allocation8 + $0xdc8] sm:$0xff]
    %v533 = vld [vmem:[#allocation8 + $0xdd0] sm:$0xff]
    %v534 = vld [vmem:[#allocation8 + $0xdd8] sm:$0xff]
    %v535 = vld [vmem:[#allocation8 + $0xde0] sm:$0xff]
    %v536 = vld [vmem:[#allocation8 + $0xde8] sm:$0xff]
    %v537 = vld [vmem:[#allocation8 + $0xdf0] sm:$0xff]
    %v538 = vld [vmem:[#allocation8 + $0xdf8] sm:$0xff]
    %v539 = vld [vmem:[#allocation8 + $0xe00] sm:$0xff]
    %v540 = vld [vmem:[#allocation8 + $0xe08] sm:$0xff]
    %v541 = vld [vmem:[#allocation8 + $0xe10] sm:$0xff]
    %v542 = vld [vmem:[#allocation8 + $0xe18] sm:$0xff]
    %v543 = vld [vmem:[#allocation8 + $0xe20] sm:$0xff]
    %v544 = vld [vmem:[#allocation8 + $0xe28] sm:$0xff]
    %v545 = vld [vmem:[#allocation8 + $0xe30] sm:$0xff]
    %v546 = vld [vmem:[#allocation8 + $0xe38] sm:$0xff]
    %v547 = vld [vmem:[#allocation8 + $0xe40] sm:$0xff]
    %v548 = vld [vmem:[#allocation8 + $0xe48] sm:$0xff]
    %v549 = vld [vmem:[#allocation8 + $0xe50] sm:$0xff]
    %v550 = vld [vmem:[#allocation8 + $0xe58] sm:$0xff]
    %v551 = vld [vmem:[#allocation8 + $0xe60] sm:$0xff]
    %v552 = vld [vmem:[#allocation8 + $0xe68] sm:$0xff]
    %v553 = vld [vmem:[#allocation8 + $0xe70] sm:$0xff]
    %v554 = vld [vmem:[#allocation8 + $0xe78] sm:$0xff]
    %v555 = vld [vmem:[#allocation8 + $0xe80] sm:$0xff]
    %v556 = vld [vmem:[#allocation8 + $0xe88] sm:$0xff]
    %v557 = vld [vmem:[#allocation8 + $0xe90] sm:$0xff]
    %v558 = vld [vmem:[#allocation8 + $0xe98] sm:$0xff]
    %v559 = vld [vmem:[#allocation8 + $0xea0] sm:$0xff]
    %v560 = vld [vmem:[#allocation8 + $0xea8] sm:$0xff]
    %v561 = vld [vmem:[#allocation8 + $0xeb0] sm:$0xff]
    %v562 = vld [vmem:[#allocation8 + $0xeb8] sm:$0xff]
    %v563 = vld [vmem:[#allocation8 + $0xec0] sm:$0xff]
    %v564 = vld [vmem:[#allocation8 + $0xec8] sm:$0xff]
    %v565 = vld [vmem:[#allocation8 + $0xed0] sm:$0xff]
    %v566 = vld [vmem:[#allocation8 + $0xed8] sm:$0xff]
    %v567 = vld [vmem:[#allocation8 + $0xee0] sm:$0xff]
    %v568 = vld [vmem:[#allocation8 + $0xee8] sm:$0xff]
    %v569 = vld [vmem:[#allocation8 + $0xef0] sm:$0xff]
    %v570 = vld [vmem:[#allocation8 + $0xef8] sm:$0xff]
    %v571 = vld [vmem:[#allocation8 + $0xf00] sm:$0xff]
    %v572 = vld [vmem:[#allocation8 + $0xf08] sm:$0xff]
    %v573 = vld [vmem:[#allocation8 + $0xf10] sm:$0xff]
    %v574 = vld [vmem:[#allocation8 + $0xf18] sm:$0xff]
    %v575 = vld [vmem:[#allocation8 + $0xf20] sm:$0xff]
    %v576 = vld [vmem:[#allocation8 + $0xf28] sm:$0xff]
    %v577 = vld [vmem:[#allocation8 + $0xf30] sm:$0xff]
    %v578 = vld [vmem:[#allocation8 + $0xf38] sm:$0xff]
    %v579 = vld [vmem:[#allocation8 + $0xf40] sm:$0xff]
    %v580 = vld [vmem:[#allocation8 + $0xf48] sm:$0xff]
    %v581 = vld [vmem:[#allocation8 + $0xf50] sm:$0xff]
    %v582 = vld [vmem:[#allocation8 + $0xf58] sm:$0xff]
    %v583 = vld [vmem:[#allocation8 + $0xf60] sm:$0xff]
    %v584 = vld [vmem:[#allocation8 + $0xf68] sm:$0xff]
    %v585 = vld [vmem:[#allocation8 + $0xf70] sm:$0xff]
    %v586 = vld [vmem:[#allocation8 + $0xf78] sm:$0xff]
    %v587 = vld [vmem:[#allocation8 + $0xf80] sm:$0xff]
    %v588 = vld [vmem:[#allocation8 + $0xf88] sm:$0xff]
    %v589 = vld [vmem:[#allocation8 + $0xf90] sm:$0xff]
    %v590 = vld [vmem:[#allocation8 + $0xf98] sm:$0xff]
    %v591 = vld [vmem:[#allocation8 + $0xfa0] sm:$0xff]
    %v592 = vld [vmem:[#allocation8 + $0xfa8] sm:$0xff]
    %v593 = vld [vmem:[#allocation8 + $0xfb0] sm:$0xff]
    %v594 = vld [vmem:[#allocation8 + $0xfb8] sm:$0xff]
    %v595 = vld [vmem:[#allocation8 + $0xfc0] sm:$0xff]
    %v596 = vld [vmem:[#allocation8 + $0xfc8] sm:$0xff]
    %v597 = vld [vmem:[#allocation8 + $0xfd0] sm:$0xff]
    %v598 = vld [vmem:[#allocation8 + $0xfd8] sm:$0xff]
    %v599 = vld [vmem:[#allocation8 + $0xfe0] sm:$0xff]
    %v600 = vld [vmem:[#allocation8 + $0xfe8] sm:$0xff]
    %v601 = vld [vmem:[#allocation8 + $0xff0] sm:$0xff]
    %v602 = vld [vmem:[#allocation8 + $0xff8] sm:$0xff]
    %v603 = vld [vmem:[#allocation8 + $0x1000] sm:$0xff]
    %v604 = vld [vmem:[#allocation8 + $0x1008] sm:$0xff]
    %v605 = vld [vmem:[#allocation8 + $0x1010] sm:$0xff]
    %v606 = vld [vmem:[#allocation8 + $0x1018] sm:$0xff]
    %v607 = vld [vmem:[#allocation8 + $0x1020] sm:$0xff]
    %v608 = vld [vmem:[#allocation8 + $0x1028] sm:$0xff]
    %v609 = vld [vmem:[#allocation8 + $0x1030] sm:$0xff]
    %v610 = vld [vmem:[#allocation8 + $0x1038] sm:$0xff]
    %v611 = vld [vmem:[#allocation8 + $0x1040] sm:$0xff]
    %v612 = vld [vmem:[#allocation8 + $0x1048] sm:$0xff]
    %v613 = vld [vmem:[#allocation8 + $0x1050] sm:$0xff]
    %v614 = vld [vmem:[#allocation8 + $0x1058] sm:$0xff]
    %v615 = vld [vmem:[#allocation8 + $0x1060] sm:$0xff]
    %v616 = vld [vmem:[#allocation8 + $0x1068] sm:$0xff]
    %v617 = vld [vmem:[#allocation8 + $0x1070] sm:$0xff]
    %v618 = vld [vmem:[#allocation8 + $0x1078] sm:$0xff]
    %v619 = vld [vmem:[#allocation8 + $0x1080] sm:$0xff]
    %v620 = vld [vmem:[#allocation8 + $0x1088] sm:$0xff]
    %v621 = vld [vmem:[#allocation8 + $0x1090] sm:$0xff]
    %v622 = vld [vmem:[#allocation8 + $0x1098] sm:$0xff]
    %v623 = vld [vmem:[#allocation8 + $0x10a0] sm:$0xff]
    %v624 = vld [vmem:[#allocation8 + $0x10a8] sm:$0xff]
    %v625 = vld [vmem:[#allocation8 + $0x10b0] sm:$0xff]
    %v626 = vld [vmem:[#allocation8 + $0x10b8] sm:$0xff]
    %v627 = vld [vmem:[#allocation8 + $0x10c0] sm:$0xff]
    %v628 = vld [vmem:[#allocation8 + $0x10c8] sm:$0xff]
    %v629 = vld [vmem:[#allocation8 + $0x10d0] sm:$0xff]
    %v630 = vld [vmem:[#allocation8 + $0x10d8] sm:$0xff]
    %v631 = vld [vmem:[#allocation8 + $0x10e0] sm:$0xff]
    %v632 = vld [vmem:[#allocation8 + $0x10e8] sm:$0xff]
    %v633 = vld [vmem:[#allocation8 + $0x10f0] sm:$0xff]
    %v634 = vld [vmem:[#allocation8 + $0x10f8] sm:$0xff]
    %v635 = vld [vmem:[#allocation8 + $0x1100] sm:$0xff]
    %v636 = vld [vmem:[#allocation8 + $0x1108] sm:$0xff]
    %v637 = vld [vmem:[#allocation8 + $0x1110] sm:$0xff]
    %v638 = vld [vmem:[#allocation8 + $0x1118] sm:$0xff]
    %v639 = vld [vmem:[#allocation8 + $0x1120] sm:$0xff]
    %v640 = vld [vmem:[#allocation8 + $0x1128] sm:$0xff]
    %v641 = vld [vmem:[#allocation8 + $0x1130] sm:$0xff]
    %v642 = vld [vmem:[#allocation8 + $0x1138] sm:$0xff]
    %v643 = vld [vmem:[#allocation8 + $0x1140] sm:$0xff]
    %v644 = vld [vmem:[#allocation8 + $0x1148] sm:$0xff]
    %v645 = vld [vmem:[#allocation8 + $0x1150] sm:$0xff]
    %v646 = vld [vmem:[#allocation8 + $0x1158] sm:$0xff]
    %v647 = vld [vmem:[#allocation8 + $0x1160] sm:$0xff]
    %v648 = vld [vmem:[#allocation8 + $0x1168] sm:$0xff]
    %v649 = vld [vmem:[#allocation8 + $0x1170] sm:$0xff]
    %v650 = vld [vmem:[#allocation8 + $0x1178] sm:$0xff]
    %v651 = vld [vmem:[#allocation8 + $0x1180] sm:$0xff]
    %v652 = vld [vmem:[#allocation8 + $0x1188] sm:$0xff]
    %v653 = vld [vmem:[#allocation8 + $0x1190] sm:$0xff]
    %v654 = vld [vmem:[#allocation8 + $0x1198] sm:$0xff]
    %v655 = vld [vmem:[#allocation8 + $0x11a0] sm:$0xff]
    %v656 = vld [vmem:[#allocation8 + $0x11a8] sm:$0xff]
    %v657 = vld [vmem:[#allocation8 + $0x11b0] sm:$0xff]
    %v658 = vld [vmem:[#allocation8 + $0x11b8] sm:$0xff]
    %v659 = vld [vmem:[#allocation8 + $0x11c0] sm:$0xff]
    %v660 = vld [vmem:[#allocation8 + $0x11c8] sm:$0xff]
    %v661 = vld [vmem:[#allocation8 + $0x11d0] sm:$0xff]
    %v662 = vld [vmem:[#allocation8 + $0x11d8] sm:$0xff]
    %v663 = vld [vmem:[#allocation8 + $0x11e0] sm:$0xff]
    %v664 = vld [vmem:[#allocation8 + $0x11e8] sm:$0xff]
    %v665 = vld [vmem:[#allocation8 + $0x11f0] sm:$0xff]
    %v666 = vld [vmem:[#allocation8 + $0x11f8] sm:$0xff]
    %v667 = vld [vmem:[#allocation8 + $0x1200] sm:$0xff]
    %v668 = vld [vmem:[#allocation8 + $0x1208] sm:$0xff]
    %v669 = vld [vmem:[#allocation8 + $0x1210] sm:$0xff]
    %v670 = vld [vmem:[#allocation8 + $0x1218] sm:$0xff]
    %v671 = vld [vmem:[#allocation8 + $0x1220] sm:$0xff]
    %v672 = vld [vmem:[#allocation8 + $0x1228] sm:$0xff]
    %v673 = vld [vmem:[#allocation8 + $0x1230] sm:$0xff]
    %v674 = vld [vmem:[#allocation8 + $0x1238] sm:$0xff]
    %v675 = vld [vmem:[#allocation8 + $0x1240] sm:$0xff]
    %v676 = vld [vmem:[#allocation8 + $0x1248] sm:$0xff]
    %v677 = vld [vmem:[#allocation8 + $0x1250] sm:$0xff]
    %v678 = vld [vmem:[#allocation8 + $0x1258] sm:$0xff]
    %v679 = vld [vmem:[#allocation8 + $0x1260] sm:$0xff]
    %v680 = vld [vmem:[#allocation8 + $0x1268] sm:$0xff]
    %v681 = vld [vmem:[#allocation8 + $0x1270] sm:$0xff]
    %v682 = vld [vmem:[#allocation8 + $0x1278] sm:$0xff]
    %v683 = vld [vmem:[#allocation8 + $0x1280] sm:$0xff]
    %v684 = vld [vmem:[#allocation8 + $0x1288] sm:$0xff]
    %v685 = vld [vmem:[#allocation8 + $0x1290] sm:$0xff]
    %v686 = vld [vmem:[#allocation8 + $0x1298] sm:$0xff]
    %v687 = vld [vmem:[#allocation8 + $0x12a0] sm:$0xff]
    %v688 = vld [vmem:[#allocation8 + $0x12a8] sm:$0xff]
    %v689 = vld [vmem:[#allocation8 + $0x12b0] sm:$0xff]
    %v690 = vld [vmem:[#allocation8 + $0x12b8] sm:$0xff]
    %v691 = vld [vmem:[#allocation8 + $0x12c0] sm:$0xff]
    %v692 = vld [vmem:[#allocation8 + $0x12c8] sm:$0xff]
    %v693 = vld [vmem:[#allocation8 + $0x12d0] sm:$0xff]
    %v694 = vld [vmem:[#allocation8 + $0x12d8] sm:$0xff]
    %v695 = vld [vmem:[#allocation8 + $0x12e0] sm:$0xff]
    %v696 = vld [vmem:[#allocation8 + $0x12e8] sm:$0xff]
    %v697 = vld [vmem:[#allocation8 + $0x12f0] sm:$0xff]
    %v698 = vld [vmem:[#allocation8 + $0x12f8] sm:$0xff]
    %v699 = vld [vmem:[#allocation8 + $0x1300] sm:$0xff]
    %v700 = vld [vmem:[#allocation8 + $0x1308] sm:$0xff]
    %v701 = vld [vmem:[#allocation8 + $0x1310] sm:$0xff]
    %v702 = vld [vmem:[#allocation8 + $0x1318] sm:$0xff]
    %v703 = vld [vmem:[#allocation8 + $0x1320] sm:$0xff]
    %v704 = vld [vmem:[#allocation8 + $0x1328] sm:$0xff]
    %v705 = vld [vmem:[#allocation8 + $0x1330] sm:$0xff]
    %v706 = vld [vmem:[#allocation8 + $0x1338] sm:$0xff]
    %v707 = vld [vmem:[#allocation8 + $0x1340] sm:$0xff]
    %v708 = vld [vmem:[#allocation8 + $0x1348] sm:$0xff]
    %v709 = vld [vmem:[#allocation8 + $0x1350] sm:$0xff]
    %v710 = vld [vmem:[#allocation8 + $0x1358] sm:$0xff]
    %v711 = vld [vmem:[#allocation8 + $0x1360] sm:$0xff]
    %v712 = vld [vmem:[#allocation8 + $0x1368] sm:$0xff]
    %v713 = vld [vmem:[#allocation8 + $0x1370] sm:$0xff]
    %v714 = vld [vmem:[#allocation8 + $0x1378] sm:$0xff]
    %v715 = vld [vmem:[#allocation8 + $0x1380] sm:$0xff]
    %v716 = vld [vmem:[#allocation8 + $0x1388] sm:$0xff]
    %v717 = vld [vmem:[#allocation8 + $0x1390] sm:$0xff]
    %v718 = vld [vmem:[#allocation8 + $0x1398] sm:$0xff]
    %v719 = vld [vmem:[#allocation8 + $0x13a0] sm:$0xff]
    %v720 = vld [vmem:[#allocation8 + $0x13a8] sm:$0xff]
    %v721 = vld [vmem:[#allocation8 + $0x13b0] sm:$0xff]
    %v722 = vld [vmem:[#allocation8 + $0x13b8] sm:$0xff]
    %v723 = vld [vmem:[#allocation8 + $0x13c0] sm:$0xff]
    %v724 = vld [vmem:[#allocation8 + $0x13c8] sm:$0xff]
    %v725 = vld [vmem:[#allocation8 + $0x13d0] sm:$0xff]
    %v726 = vld [vmem:[#allocation8 + $0x13d8] sm:$0xff]
    %v727 = vld [vmem:[#allocation8 + $0x13e0] sm:$0xff]
    %v728 = vld [vmem:[#allocation8 + $0x13e8] sm:$0xff]
    %v729 = vld [vmem:[#allocation8 + $0x13f0] sm:$0xff]
    %v730 = vld [vmem:[#allocation8 + $0x13f8] sm:$0xff]
    %v731 = vld [vmem:[#allocation8 + $0x1400] sm:$0xff]
    %v732 = vld [vmem:[#allocation8 + $0x1408] sm:$0xff]
    %v733 = vld [vmem:[#allocation8 + $0x1410] sm:$0xff]
    %v734 = vld [vmem:[#allocation8 + $0x1418] sm:$0xff]
    %v735 = vld [vmem:[#allocation8 + $0x1420] sm:$0xff]
    %v736 = vld [vmem:[#allocation8 + $0x1428] sm:$0xff]
    %v737 = vld [vmem:[#allocation8 + $0x1430] sm:$0xff]
    %v738 = vld [vmem:[#allocation8 + $0x1438] sm:$0xff]
    %v739 = vld [vmem:[#allocation8 + $0x1440] sm:$0xff]
    %v740 = vld [vmem:[#allocation8 + $0x1448] sm:$0xff]
    %v741 = vld [vmem:[#allocation8 + $0x1450] sm:$0xff]
    %v742 = vld [vmem:[#allocation8 + $0x1458] sm:$0xff]
    %v743 = vld [vmem:[#allocation8 + $0x1460] sm:$0xff]
    %v744 = vld [vmem:[#allocation8 + $0x1468] sm:$0xff]
    %v745 = vld [vmem:[#allocation8 + $0x1470] sm:$0xff]
    %v746 = vld [vmem:[#allocation8 + $0x1478] sm:$0xff]
    %v747 = vld [vmem:[#allocation8 + $0x1480] sm:$0xff]
    %v748 = vld [vmem:[#allocation8 + $0x1488] sm:$0xff]
    %v749 = vld [vmem:[#allocation8 + $0x1490] sm:$0xff]
    %v750 = vld [vmem:[#allocation8 + $0x1498] sm:$0xff]
    %v751 = vld [vmem:[#allocation8 + $0x14a0] sm:$0xff]
    %v752 = vld [vmem:[#allocation8 + $0x14a8] sm:$0xff]
    %v753 = vld [vmem:[#allocation8 + $0x14b0] sm:$0xff]
    %v754 = vld [vmem:[#allocation8 + $0x14b8] sm:$0xff]
    %v755 = vld [vmem:[#allocation8 + $0x14c0] sm:$0xff]
    %v756 = vld [vmem:[#allocation8 + $0x14c8] sm:$0xff]
    %v757 = vld [vmem:[#allocation8 + $0x14d0] sm:$0xff]
    %v758 = vld [vmem:[#allocation8 + $0x14d8] sm:$0xff]
    %v759 = vld [vmem:[#allocation8 + $0x14e0] sm:$0xff]
    %v760 = vld [vmem:[#allocation8 + $0x14e8] sm:$0xff]
    %v761 = vld [vmem:[#allocation8 + $0x14f0] sm:$0xff]
    %v762 = vld [vmem:[#allocation8 + $0x14f8] sm:$0xff]
    %v763 = vld [vmem:[#allocation8 + $0x1500] sm:$0xff]
    %v764 = vld [vmem:[#allocation8 + $0x1508] sm:$0xff]
    %v765 = vld [vmem:[#allocation8 + $0x1510] sm:$0xff]
    %v766 = vld [vmem:[#allocation8 + $0x1518] sm:$0xff]
    %v767 = vld [vmem:[#allocation8 + $0x1520] sm:$0xff]
    %v768 = vld [vmem:[#allocation8 + $0x1528] sm:$0xff]
    %v769 = vld [vmem:[#allocation8 + $0x1530] sm:$0xff]
    %v770 = vld [vmem:[#allocation8 + $0x1538] sm:$0xff]
    %v771 = vld [vmem:[#allocation8 + $0x1540] sm:$0xff]
    %v772 = vld [vmem:[#allocation8 + $0x1548] sm:$0xff]
    %v773 = vld [vmem:[#allocation8 + $0x1550] sm:$0xff]
    %v774 = vld [vmem:[#allocation8 + $0x1558] sm:$0xff]
    %v775 = vld [vmem:[#allocation8 + $0x1560] sm:$0xff]
    %v776 = vld [vmem:[#allocation8 + $0x1568] sm:$0xff]
    %v777 = vld [vmem:[#allocation8 + $0x1570] sm:$0xff]
    %v778 = vld [vmem:[#allocation8 + $0x1578] sm:$0xff]
    %v779 = vld [vmem:[#allocation8 + $0x1580] sm:$0xff]
    %v780 = vld [vmem:[#allocation8 + $0x1588] sm:$0xff]
    %v781 = vld [vmem:[#allocation8 + $0x1590] sm:$0xff]
    %v782 = vld [vmem:[#allocation8 + $0x1598] sm:$0xff]
    %v783 = vld [vmem:[#allocation8 + $0x15a0] sm:$0xff]
    %v784 = vld [vmem:[#allocation8 + $0x15a8] sm:$0xff]
    %v785 = vld [vmem:[#allocation8 + $0x15b0] sm:$0xff]
    %v786 = vld [vmem:[#allocation8 + $0x15b8] sm:$0xff]
    %v787 = vld [vmem:[#allocation8 + $0x15c0] sm:$0xff]
    %v788 = vld [vmem:[#allocation8 + $0x15c8] sm:$0xff]
    %v789 = vld [vmem:[#allocation8 + $0x15d0] sm:$0xff]
    %v790 = vld [vmem:[#allocation8 + $0x15d8] sm:$0xff]
    %v791 = vld [vmem:[#allocation8 + $0x15e0] sm:$0xff]
    %v792 = vld [vmem:[#allocation8 + $0x15e8] sm:$0xff]
    %v793 = vld [vmem:[#allocation8 + $0x15f0] sm:$0xff]
    %v794 = vld [vmem:[#allocation8 + $0x15f8] sm:$0xff]
    %v795 = vld [vmem:[#allocation8 + $0x1600] sm:$0xff]
    %v796 = vld [vmem:[#allocation8 + $0x1608] sm:$0xff]
    %v797 = vld [vmem:[#allocation8 + $0x1610] sm:$0xff]
    %v798 = vld [vmem:[#allocation8 + $0x1618] sm:$0xff]
    %v799 = vld [vmem:[#allocation8 + $0x1620] sm:$0xff]
    %v800 = vld [vmem:[#allocation8 + $0x1628] sm:$0xff]
    %v801 = vld [vmem:[#allocation8 + $0x1630] sm:$0xff]
    %v802 = vld [vmem:[#allocation8 + $0x1638] sm:$0xff]
    %v803 = vld [vmem:[#allocation8 + $0x1640] sm:$0xff]
    %v804 = vld [vmem:[#allocation8 + $0x1648] sm:$0xff]
    %v805 = vld [vmem:[#allocation8 + $0x1650] sm:$0xff]
    %v806 = vld [vmem:[#allocation8 + $0x1658] sm:$0xff]
    %v807 = vld [vmem:[#allocation8 + $0x1660] sm:$0xff]
    %v808 = vld [vmem:[#allocation8 + $0x1668] sm:$0xff]
    %v809 = vld [vmem:[#allocation8 + $0x1670] sm:$0xff]
    %v810 = vld [vmem:[#allocation8 + $0x1678] sm:$0xff]
    %v811 = vld [vmem:[#allocation8 + $0x1680] sm:$0xff]
    %v812 = vld [vmem:[#allocation8 + $0x1688] sm:$0xff]
    %v813 = vld [vmem:[#allocation8 + $0x1690] sm:$0xff]
    %v814 = vld [vmem:[#allocation8 + $0x1698] sm:$0xff]
    %v815 = vld [vmem:[#allocation8 + $0x16a0] sm:$0xff]
    %v816 = vld [vmem:[#allocation8 + $0x16a8] sm:$0xff]
    %v817 = vld [vmem:[#allocation8 + $0x16b0] sm:$0xff]
    %v818 = vld [vmem:[#allocation8 + $0x16b8] sm:$0xff]
    %v819 = vld [vmem:[#allocation8 + $0x16c0] sm:$0xff]
    %v820 = vld [vmem:[#allocation8 + $0x16c8] sm:$0xff]
    %v821 = vld [vmem:[#allocation8 + $0x16d0] sm:$0xff]
    %v822 = vld [vmem:[#allocation8 + $0x16d8] sm:$0xff]
    %v823 = vld [vmem:[#allocation8 + $0x16e0] sm:$0xff]
    %v824 = vld [vmem:[#allocation8 + $0x16e8] sm:$0xff]
    %v825 = vld [vmem:[#allocation8 + $0x16f0] sm:$0xff]
    %v826 = vld [vmem:[#allocation8 + $0x16f8] sm:$0xff]
    %v827 = vld [vmem:[#allocation8 + $0x1700] sm:$0xff]
    %v828 = vld [vmem:[#allocation8 + $0x1708] sm:$0xff]
    %v829 = vld [vmem:[#allocation8 + $0x1710] sm:$0xff]
    %v830 = vld [vmem:[#allocation8 + $0x1718] sm:$0xff]
    %v831 = vld [vmem:[#allocation8 + $0x1720] sm:$0xff]
    %v832 = vld [vmem:[#allocation8 + $0x1728] sm:$0xff]
    %v833 = vld [vmem:[#allocation8 + $0x1730] sm:$0xff]
    %v834 = vld [vmem:[#allocation8 + $0x1738] sm:$0xff]
    %v835 = vld [vmem:[#allocation8 + $0x1740] sm:$0xff]
    %v836 = vld [vmem:[#allocation8 + $0x1748] sm:$0xff]
    %v837 = vld [vmem:[#allocation8 + $0x1750] sm:$0xff]
    %v838 = vld [vmem:[#allocation8 + $0x1758] sm:$0xff]
    %v839 = vld [vmem:[#allocation8 + $0x1760] sm:$0xff]
    %v840 = vld [vmem:[#allocation8 + $0x1768] sm:$0xff]
    %v841 = vld [vmem:[#allocation8 + $0x1770] sm:$0xff]
    %v842 = vld [vmem:[#allocation8 + $0x1778] sm:$0xff]
    %v843 = vld [vmem:[#allocation8 + $0x1780] sm:$0xff]
    %v844 = vld [vmem:[#allocation8 + $0x1788] sm:$0xff]
    %v845 = vld [vmem:[#allocation8 + $0x1790] sm:$0xff]
    %v846 = vld [vmem:[#allocation8 + $0x1798] sm:$0xff]
    %v847 = vld [vmem:[#allocation8 + $0x17a0] sm:$0xff]
    %v848 = vld [vmem:[#allocation8 + $0x17a8] sm:$0xff]
    %v849 = vld [vmem:[#allocation8 + $0x17b0] sm:$0xff]
    %v850 = vld [vmem:[#allocation8 + $0x17b8] sm:$0xff]
    %v851 = vld [vmem:[#allocation8 + $0x17c0] sm:$0xff]
    %v852 = vld [vmem:[#allocation8 + $0x17c8] sm:$0xff]
    %v853 = vld [vmem:[#allocation8 + $0x17d0] sm:$0xff]
    %v854 = vld [vmem:[#allocation8 + $0x17d8] sm:$0xff]
    %v855 = vld [vmem:[#allocation8 + $0x17e0] sm:$0xff]
    %v856 = vld [vmem:[#allocation8 + $0x17e8] sm:$0xff]
    %v857 = vld [vmem:[#allocation8 + $0x17f0] sm:$0xff]
    %v858 = vld [vmem:[#allocation8 + $0x17f8] sm:$0xff]
    %v859 = vpack.c.bf16 %v99, %v91
    %v860 = vpack.c.bf16 %v100, %v92
    %v861 = vpack.c.bf16 %v101, %v93
    %v862 = vpack.c.bf16 %v102, %v94
    %v863 = vpack.c.bf16 %v103, %v95
    %v864 = vpack.c.bf16 %v104, %v96
    %v865 = vpack.c.bf16 %v105, %v97
    %v866 = vpack.c.bf16 %v106, %v98
    %v867 = vpack.c.bf16 %v115, %v107
    %v868 = vpack.c.bf16 %v116, %v108
    %v869 = vpack.c.bf16 %v117, %v109
    %v870 = vpack.c.bf16 %v118, %v110
    %v871 = vpack.c.bf16 %v119, %v111
    %v872 = vpack.c.bf16 %v120, %v112
    %v873 = vpack.c.bf16 %v121, %v113
    %v874 = vpack.c.bf16 %v122, %v114
    %v875 = vpack.c.bf16 %v131, %v123
    %v876 = vpack.c.bf16 %v132, %v124
    %v877 = vpack.c.bf16 %v133, %v125
    %v878 = vpack.c.bf16 %v134, %v126
    %v879 = vpack.c.bf16 %v135, %v127
    %v880 = vpack.c.bf16 %v136, %v128
    %v881 = vpack.c.bf16 %v137, %v129
    %v882 = vpack.c.bf16 %v138, %v130
    %v883 = vpack.c.bf16 %v147, %v139
    %v884 = vpack.c.bf16 %v148, %v140
    %v885 = vpack.c.bf16 %v149, %v141
    %v886 = vpack.c.bf16 %v150, %v142
    %v887 = vpack.c.bf16 %v151, %v143
    %v888 = vpack.c.bf16 %v152, %v144
    %v889 = vpack.c.bf16 %v153, %v145
    %v890 = vpack.c.bf16 %v154, %v146
    %v891 = vpack.c.bf16 %v163, %v155
    %v892 = vpack.c.bf16 %v164, %v156
    %v893 = vpack.c.bf16 %v165, %v157
    %v894 = vpack.c.bf16 %v166, %v158
    %v895 = vpack.c.bf16 %v167, %v159
    %v896 = vpack.c.bf16 %v168, %v160
    %v897 = vpack.c.bf16 %v169, %v161
    %v898 = vpack.c.bf16 %v170, %v162
    %v899 = vpack.c.bf16 %v179, %v171
    %v900 = vpack.c.bf16 %v180, %v172
    %v901 = vpack.c.bf16 %v181, %v173
    %v902 = vpack.c.bf16 %v182, %v174
    %v903 = vpack.c.bf16 %v183, %v175
    %v904 = vpack.c.bf16 %v184, %v176
    %v905 = vpack.c.bf16 %v185, %v177
    %v906 = vpack.c.bf16 %v186, %v178
    %v907 = vpack.c.bf16 %v195, %v187
    %v908 = vpack.c.bf16 %v196, %v188
    %v909 = vpack.c.bf16 %v197, %v189
    %v910 = vpack.c.bf16 %v198, %v190
    %v911 = vpack.c.bf16 %v199, %v191
    %v912 = vpack.c.bf16 %v200, %v192
    %v913 = vpack.c.bf16 %v201, %v193
    %v914 = vpack.c.bf16 %v202, %v194
    %v915 = vpack.c.bf16 %v211, %v203
    %v916 = vpack.c.bf16 %v212, %v204
    %v917 = vpack.c.bf16 %v213, %v205
    %v918 = vpack.c.bf16 %v214, %v206
    %v919 = vpack.c.bf16 %v215, %v207
    %v920 = vpack.c.bf16 %v216, %v208
    %v921 = vpack.c.bf16 %v217, %v209
    %v922 = vpack.c.bf16 %v218, %v210
    %v923 = vpack.c.bf16 %v227, %v219
    %v924 = vpack.c.bf16 %v228, %v220
    %v925 = vpack.c.bf16 %v229, %v221
    %v926 = vpack.c.bf16 %v230, %v222
    %v927 = vpack.c.bf16 %v231, %v223
    %v928 = vpack.c.bf16 %v232, %v224
    %v929 = vpack.c.bf16 %v233, %v225
    %v930 = vpack.c.bf16 %v234, %v226
    %v931 = vpack.c.bf16 %v243, %v235
    %v932 = vpack.c.bf16 %v244, %v236
    %v933 = vpack.c.bf16 %v245, %v237
    %v934 = vpack.c.bf16 %v246, %v238
    %v935 = vpack.c.bf16 %v247, %v239
    %v936 = vpack.c.bf16 %v248, %v240
    %v937 = vpack.c.bf16 %v249, %v241
    %v938 = vpack.c.bf16 %v250, %v242
    %v939 = vpack.c.bf16 %v259, %v251
    %v940 = vpack.c.bf16 %v260, %v252
    %v941 = vpack.c.bf16 %v261, %v253
    %v942 = vpack.c.bf16 %v262, %v254
    %v943 = vpack.c.bf16 %v263, %v255
    %v944 = vpack.c.bf16 %v264, %v256
    %v945 = vpack.c.bf16 %v265, %v257
    %v946 = vpack.c.bf16 %v266, %v258
    %v947 = vpack.c.bf16 %v275, %v267
    %v948 = vpack.c.bf16 %v276, %v268
    %v949 = vpack.c.bf16 %v277, %v269
    %v950 = vpack.c.bf16 %v278, %v270
    %v951 = vpack.c.bf16 %v279, %v271
    %v952 = vpack.c.bf16 %v280, %v272
    %v953 = vpack.c.bf16 %v281, %v273
    %v954 = vpack.c.bf16 %v282, %v274
    %v955 = vpack.c.bf16 %v291, %v283
    %v956 = vpack.c.bf16 %v292, %v284
    %v957 = vpack.c.bf16 %v293, %v285
    %v958 = vpack.c.bf16 %v294, %v286
    %v959 = vpack.c.bf16 %v295, %v287
    %v960 = vpack.c.bf16 %v296, %v288
    %v961 = vpack.c.bf16 %v297, %v289
    %v962 = vpack.c.bf16 %v298, %v290
    %v963 = vpack.c.bf16 %v307, %v299
    %v964 = vpack.c.bf16 %v308, %v300
    %v965 = vpack.c.bf16 %v309, %v301
    %v966 = vpack.c.bf16 %v310, %v302
    %v967 = vpack.c.bf16 %v311, %v303
    %v968 = vpack.c.bf16 %v312, %v304
    %v969 = vpack.c.bf16 %v313, %v305
    %v970 = vpack.c.bf16 %v314, %v306
    %v971 = vpack.c.bf16 %v323, %v315
    %v972 = vpack.c.bf16 %v324, %v316
    %v973 = vpack.c.bf16 %v325, %v317
    %v974 = vpack.c.bf16 %v326, %v318
    %v975 = vpack.c.bf16 %v327, %v319
    %v976 = vpack.c.bf16 %v328, %v320
    %v977 = vpack.c.bf16 %v329, %v321
    %v978 = vpack.c.bf16 %v330, %v322
    %v979 = vpack.c.bf16 %v339, %v331
    %v980 = vpack.c.bf16 %v340, %v332
    %v981 = vpack.c.bf16 %v341, %v333
    %v982 = vpack.c.bf16 %v342, %v334
    %v983 = vpack.c.bf16 %v343, %v335
    %v984 = vpack.c.bf16 %v344, %v336
    %v985 = vpack.c.bf16 %v345, %v337
    %v986 = vpack.c.bf16 %v346, %v338
    %v987 = vpack.c.bf16 %v355, %v347
    %v988 = vpack.c.bf16 %v356, %v348
    %v989 = vpack.c.bf16 %v357, %v349
    %v990 = vpack.c.bf16 %v358, %v350
    %v991 = vpack.c.bf16 %v359, %v351
    %v992 = vpack.c.bf16 %v360, %v352
    %v993 = vpack.c.bf16 %v361, %v353
    %v994 = vpack.c.bf16 %v362, %v354
    %v995 = vpack.c.bf16 %v371, %v363
    %v996 = vpack.c.bf16 %v372, %v364
    %v997 = vpack.c.bf16 %v373, %v365
    %v998 = vpack.c.bf16 %v374, %v366
    %v999 = vpack.c.bf16 %v375, %v367
    %v1000 = vpack.c.bf16 %v376, %v368
    %v1001 = vpack.c.bf16 %v377, %v369
    %v1002 = vpack.c.bf16 %v378, %v370
    %v1003 = vpack.c.bf16 %v387, %v379
    %v1004 = vpack.c.bf16 %v388, %v380
    %v1005 = vpack.c.bf16 %v389, %v381
    %v1006 = vpack.c.bf16 %v390, %v382
    %v1007 = vpack.c.bf16 %v391, %v383
    %v1008 = vpack.c.bf16 %v392, %v384
    %v1009 = vpack.c.bf16 %v393, %v385
    %v1010 = vpack.c.bf16 %v394, %v386
    %v1011 = vpack.c.bf16 %v403, %v395
    %v1012 = vpack.c.bf16 %v404, %v396
    %v1013 = vpack.c.bf16 %v405, %v397
    %v1014 = vpack.c.bf16 %v406, %v398
    %v1015 = vpack.c.bf16 %v407, %v399
    %v1016 = vpack.c.bf16 %v408, %v400
    %v1017 = vpack.c.bf16 %v409, %v401
    %v1018 = vpack.c.bf16 %v410, %v402
    %v1019 = vpack.c.bf16 %v419, %v411
    %v1020 = vpack.c.bf16 %v420, %v412
    %v1021 = vpack.c.bf16 %v421, %v413
    %v1022 = vpack.c.bf16 %v422, %v414
    %v1023 = vpack.c.bf16 %v423, %v415
    %v1024 = vpack.c.bf16 %v424, %v416
    %v1025 = vpack.c.bf16 %v425, %v417
    %v1026 = vpack.c.bf16 %v426, %v418
    %v1027 = vpack.c.bf16 %v435, %v427
    %v1028 = vpack.c.bf16 %v436, %v428
    %v1029 = vpack.c.bf16 %v437, %v429
    %v1030 = vpack.c.bf16 %v438, %v430
    %v1031 = vpack.c.bf16 %v439, %v431
    %v1032 = vpack.c.bf16 %v440, %v432
    %v1033 = vpack.c.bf16 %v441, %v433
    %v1034 = vpack.c.bf16 %v442, %v434
    %v1035 = vpack.c.bf16 %v451, %v443
    %v1036 = vpack.c.bf16 %v452, %v444
    %v1037 = vpack.c.bf16 %v453, %v445
    %v1038 = vpack.c.bf16 %v454, %v446
    %v1039 = vpack.c.bf16 %v455, %v447
    %v1040 = vpack.c.bf16 %v456, %v448
    %v1041 = vpack.c.bf16 %v457, %v449
    %v1042 = vpack.c.bf16 %v458, %v450
    %v1043 = vpack.c.bf16 %v467, %v459
    %v1044 = vpack.c.bf16 %v468, %v460
    %v1045 = vpack.c.bf16 %v469, %v461
    %v1046 = vpack.c.bf16 %v470, %v462
    %v1047 = vpack.c.bf16 %v471, %v463
    %v1048 = vpack.c.bf16 %v472, %v464
    %v1049 = vpack.c.bf16 %v473, %v465
    %v1050 = vpack.c.bf16 %v474, %v466
    %v1051 = vpack.c.bf16 %v483, %v475
    %v1052 = vpack.c.bf16 %v484, %v476
    %v1053 = vpack.c.bf16 %v485, %v477
    %v1054 = vpack.c.bf16 %v486, %v478
    %v1055 = vpack.c.bf16 %v487, %v479
    %v1056 = vpack.c.bf16 %v488, %v480
    %v1057 = vpack.c.bf16 %v489, %v481
    %v1058 = vpack.c.bf16 %v490, %v482
    %v1059 = vpack.c.bf16 %v499, %v491
    %v1060 = vpack.c.bf16 %v500, %v492
    %v1061 = vpack.c.bf16 %v501, %v493
    %v1062 = vpack.c.bf16 %v502, %v494
    %v1063 = vpack.c.bf16 %v503, %v495
    %v1064 = vpack.c.bf16 %v504, %v496
    %v1065 = vpack.c.bf16 %v505, %v497
    %v1066 = vpack.c.bf16 %v506, %v498
    %v1067 = vpack.c.bf16 %v515, %v507
    %v1068 = vpack.c.bf16 %v516, %v508
    %v1069 = vpack.c.bf16 %v517, %v509
    %v1070 = vpack.c.bf16 %v518, %v510
    %v1071 = vpack.c.bf16 %v519, %v511
    %v1072 = vpack.c.bf16 %v520, %v512
    %v1073 = vpack.c.bf16 %v521, %v513
    %v1074 = vpack.c.bf16 %v522, %v514
    %v1075 = vpack.c.bf16 %v531, %v523
    %v1076 = vpack.c.bf16 %v532, %v524
    %v1077 = vpack.c.bf16 %v533, %v525
    %v1078 = vpack.c.bf16 %v534, %v526
    %v1079 = vpack.c.bf16 %v535, %v527
    %v1080 = vpack.c.bf16 %v536, %v528
    %v1081 = vpack.c.bf16 %v537, %v529
    %v1082 = vpack.c.bf16 %v538, %v530
    %v1083 = vpack.c.bf16 %v547, %v539
    %v1084 = vpack.c.bf16 %v548, %v540
    %v1085 = vpack.c.bf16 %v549, %v541
    %v1086 = vpack.c.bf16 %v550, %v542
    %v1087 = vpack.c.bf16 %v551, %v543
    %v1088 = vpack.c.bf16 %v552, %v544
    %v1089 = vpack.c.bf16 %v553, %v545
    %v1090 = vpack.c.bf16 %v554, %v546
    %v1091 = vpack.c.bf16 %v563, %v555
    %v1092 = vpack.c.bf16 %v564, %v556
    %v1093 = vpack.c.bf16 %v565, %v557
    %v1094 = vpack.c.bf16 %v566, %v558
    %v1095 = vpack.c.bf16 %v567, %v559
    %v1096 = vpack.c.bf16 %v568, %v560
    %v1097 = vpack.c.bf16 %v569, %v561
    %v1098 = vpack.c.bf16 %v570, %v562
    %v1099 = vpack.c.bf16 %v579, %v571
    %v1100 = vpack.c.bf16 %v580, %v572
    %v1101 = vpack.c.bf16 %v581, %v573
    %v1102 = vpack.c.bf16 %v582, %v574
    %v1103 = vpack.c.bf16 %v583, %v575
    %v1104 = vpack.c.bf16 %v584, %v576
    %v1105 = vpack.c.bf16 %v585, %v577
    %v1106 = vpack.c.bf16 %v586, %v578
    %v1107 = vpack.c.bf16 %v595, %v587
    %v1108 = vpack.c.bf16 %v596, %v588
    %v1109 = vpack.c.bf16 %v597, %v589
    %v1110 = vpack.c.bf16 %v598, %v590
    %v1111 = vpack.c.bf16 %v599, %v591
    %v1112 = vpack.c.bf16 %v600, %v592
    %v1113 = vpack.c.bf16 %v601, %v593
    %v1114 = vpack.c.bf16 %v602, %v594
    %v1115 = vpack.c.bf16 %v611, %v603
    %v1116 = vpack.c.bf16 %v612, %v604
    %v1117 = vpack.c.bf16 %v613, %v605
    %v1118 = vpack.c.bf16 %v614, %v606
    %v1119 = vpack.c.bf16 %v615, %v607
    %v1120 = vpack.c.bf16 %v616, %v608
    %v1121 = vpack.c.bf16 %v617, %v609
    %v1122 = vpack.c.bf16 %v618, %v610
    %v1123 = vpack.c.bf16 %v627, %v619
    %v1124 = vpack.c.bf16 %v628, %v620
    %v1125 = vpack.c.bf16 %v629, %v621
    %v1126 = vpack.c.bf16 %v630, %v622
    %v1127 = vpack.c.bf16 %v631, %v623
    %v1128 = vpack.c.bf16 %v632, %v624
    %v1129 = vpack.c.bf16 %v633, %v625
    %v1130 = vpack.c.bf16 %v634, %v626
    %v1131 = vpack.c.bf16 %v643, %v635
    %v1132 = vpack.c.bf16 %v644, %v636
    %v1133 = vpack.c.bf16 %v645, %v637
    %v1134 = vpack.c.bf16 %v646, %v638
    %v1135 = vpack.c.bf16 %v647, %v639
    %v1136 = vpack.c.bf16 %v648, %v640
    %v1137 = vpack.c.bf16 %v649, %v641
    %v1138 = vpack.c.bf16 %v650, %v642
    %v1139 = vpack.c.bf16 %v659, %v651
    %v1140 = vpack.c.bf16 %v660, %v652
    %v1141 = vpack.c.bf16 %v661, %v653
    %v1142 = vpack.c.bf16 %v662, %v654
    %v1143 = vpack.c.bf16 %v663, %v655
    %v1144 = vpack.c.bf16 %v664, %v656
    %v1145 = vpack.c.bf16 %v665, %v657
    %v1146 = vpack.c.bf16 %v666, %v658
    %v1147 = vpack.c.bf16 %v675, %v667
    %v1148 = vpack.c.bf16 %v676, %v668
    %v1149 = vpack.c.bf16 %v677, %v669
    %v1150 = vpack.c.bf16 %v678, %v670
    %v1151 = vpack.c.bf16 %v679, %v671
    %v1152 = vpack.c.bf16 %v680, %v672
    %v1153 = vpack.c.bf16 %v681, %v673
    %v1154 = vpack.c.bf16 %v682, %v674
    %v1155 = vpack.c.bf16 %v691, %v683
    %v1156 = vpack.c.bf16 %v692, %v684
    %v1157 = vpack.c.bf16 %v693, %v685
    %v1158 = vpack.c.bf16 %v694, %v686
    %v1159 = vpack.c.bf16 %v695, %v687
    %v1160 = vpack.c.bf16 %v696, %v688
    %v1161 = vpack.c.bf16 %v697, %v689
    %v1162 = vpack.c.bf16 %v698, %v690
    %v1163 = vpack.c.bf16 %v707, %v699
    %v1164 = vpack.c.bf16 %v708, %v700
    %v1165 = vpack.c.bf16 %v709, %v701
    %v1166 = vpack.c.bf16 %v710, %v702
    %v1167 = vpack.c.bf16 %v711, %v703
    %v1168 = vpack.c.bf16 %v712, %v704
    %v1169 = vpack.c.bf16 %v713, %v705
    %v1170 = vpack.c.bf16 %v714, %v706
    %v1171 = vpack.c.bf16 %v723, %v715
    %v1172 = vpack.c.bf16 %v724, %v716
    %v1173 = vpack.c.bf16 %v725, %v717
    %v1174 = vpack.c.bf16 %v726, %v718
    %v1175 = vpack.c.bf16 %v727, %v719
    %v1176 = vpack.c.bf16 %v728, %v720
    %v1177 = vpack.c.bf16 %v729, %v721
    %v1178 = vpack.c.bf16 %v730, %v722
    %v1179 = vpack.c.bf16 %v739, %v731
    %v1180 = vpack.c.bf16 %v740, %v732
    %v1181 = vpack.c.bf16 %v741, %v733
    %v1182 = vpack.c.bf16 %v742, %v734
    %v1183 = vpack.c.bf16 %v743, %v735
    %v1184 = vpack.c.bf16 %v744, %v736
    %v1185 = vpack.c.bf16 %v745, %v737
    %v1186 = vpack.c.bf16 %v746, %v738
    %v1187 = vpack.c.bf16 %v755, %v747
    %v1188 = vpack.c.bf16 %v756, %v748
    %v1189 = vpack.c.bf16 %v757, %v749
    %v1190 = vpack.c.bf16 %v758, %v750
    %v1191 = vpack.c.bf16 %v759, %v751
    %v1192 = vpack.c.bf16 %v760, %v752
    %v1193 = vpack.c.bf16 %v761, %v753
    %v1194 = vpack.c.bf16 %v762, %v754
    %v1195 = vpack.c.bf16 %v771, %v763
    %v1196 = vpack.c.bf16 %v772, %v764
    %v1197 = vpack.c.bf16 %v773, %v765
    %v1198 = vpack.c.bf16 %v774, %v766
    %v1199 = vpack.c.bf16 %v775, %v767
    %v1200 = vpack.c.bf16 %v776, %v768
    %v1201 = vpack.c.bf16 %v777, %v769
    %v1202 = vpack.c.bf16 %v778, %v770
    %v1203 = vpack.c.bf16 %v787, %v779
    %v1204 = vpack.c.bf16 %v788, %v780
    %v1205 = vpack.c.bf16 %v789, %v781
    %v1206 = vpack.c.bf16 %v790, %v782
    %v1207 = vpack.c.bf16 %v791, %v783
    %v1208 = vpack.c.bf16 %v792, %v784
    %v1209 = vpack.c.bf16 %v793, %v785
    %v1210 = vpack.c.bf16 %v794, %v786
    %v1211 = vpack.c.bf16 %v803, %v795
    %v1212 = vpack.c.bf16 %v804, %v796
    %v1213 = vpack.c.bf16 %v805, %v797
    %v1214 = vpack.c.bf16 %v806, %v798
    %v1215 = vpack.c.bf16 %v807, %v799
    %v1216 = vpack.c.bf16 %v808, %v800
    %v1217 = vpack.c.bf16 %v809, %v801
    %v1218 = vpack.c.bf16 %v810, %v802
    %v1219 = vpack.c.bf16 %v819, %v811
    %v1220 = vpack.c.bf16 %v820, %v812
    %v1221 = vpack.c.bf16 %v821, %v813
    %v1222 = vpack.c.bf16 %v822, %v814
    %v1223 = vpack.c.bf16 %v823, %v815
    %v1224 = vpack.c.bf16 %v824, %v816
    %v1225 = vpack.c.bf16 %v825, %v817
    %v1226 = vpack.c.bf16 %v826, %v818
    %v1227 = vpack.c.bf16 %v835, %v827
    %v1228 = vpack.c.bf16 %v836, %v828
    %v1229 = vpack.c.bf16 %v837, %v829
    %v1230 = vpack.c.bf16 %v838, %v830
    %v1231 = vpack.c.bf16 %v839, %v831
    %v1232 = vpack.c.bf16 %v840, %v832
    %v1233 = vpack.c.bf16 %v841, %v833
    %v1234 = vpack.c.bf16 %v842, %v834
    %v1235 = vpack.c.bf16 %v851, %v843
    %v1236 = vpack.c.bf16 %v852, %v844
    %v1237 = vpack.c.bf16 %v853, %v845
    %v1238 = vpack.c.bf16 %v854, %v846
    %v1239 = vpack.c.bf16 %v855, %v847
    %v1240 = vpack.c.bf16 %v856, %v848
    %v1241 = vpack.c.bf16 %v857, %v849
    %v1242 = vpack.c.bf16 %v858, %v850
    %v1243 = vld [vmem:[#allocation9] sm:$0xff]
    %v1245 = vlaneseq
    %v1246 = vshrl.u32 %v1245, 7
    %v1247 = vsub.s32 0, %v1246
    %v1248 = vrot.slane %v1243, %v1247
    %v1249 = vlaneseq
    %v1250 = vshrl.u32 %v1249, 7
    %v1251 = vsub.s32 1, %v1250
    %v1252 = vrot.slane %v1243, %v1251
    %v1253 = vlaneseq
    %v1254 = vshrl.u32 %v1253, 7
    %v1255 = vsub.s32 2, %v1254
    %v1256 = vrot.slane %v1243, %v1255
    %v1257 = vlaneseq
    %v1258 = vshrl.u32 %v1257, 7
    %v1259 = vsub.s32 3, %v1258
    %v1260 = vrot.slane %v1243, %v1259
    %v1261 = vlaneseq
    %v1262 = vshrl.u32 %v1261, 7
    %v1263 = vsub.s32 4, %v1262
    %v1264 = vrot.slane %v1243, %v1263
    %v1265 = vlaneseq
    %v1266 = vshrl.u32 %v1265, 7
    %v1267 = vsub.s32 5, %v1266
    %v1268 = vrot.slane %v1243, %v1267
    %v1269 = vlaneseq
    %v1270 = vshrl.u32 %v1269, 7
    %v1271 = vsub.s32 6, %v1270
    %v1272 = vrot.slane %v1243, %v1271
    %v1273 = vlaneseq
    %v1274 = vshrl.u32 %v1273, 7
    %v1275 = vsub.s32 7, %v1274
    %v1276 = vrot.slane %v1243, %v1275
    %1285 = vmatprep.subr.bf16.mxu0 %v916
    %1286 = vmatpush1.bf16.msra.mxu0 %v915
    %1287 = vmatprep.subr.bf16.mxu0 %v908
    %1288 = vmatpush1.bf16.msra.mxu0 %v907
    %1289 = vmatprep.subr.bf16.mxu0 %v900
    %1290 = vmatpush1.bf16.msra.mxu0 %v899
    %1291 = vmatprep.subr.bf16.mxu0 %v892
    %1292 = vmatpush1.bf16.msra.mxu0 %v891
    %1293 = vmatprep.subr.bf16.mxu0 %v884
    %1294 = vmatpush1.bf16.msra.mxu0 %v883
    %1295 = vmatprep.subr.bf16.mxu0 %v876
    %1296 = vmatpush1.bf16.msra.mxu0 %v875
    %1297 = vmatprep.subr.bf16.mxu0 %v868
    %1298 = vmatpush1.bf16.msra.mxu0 %v867
    %1299 = vmatprep.subr.bf16.mxu0 %v860
    %1300 = vmatpush1.bf16.msra.mxu0 %v859
    %1301 = vmatprep.subr.bf16.mxu0 %v980
    %1302 = vmatpush2.bf16.msra.mxu0 %v979
    %1303 = vmatprep.subr.bf16.mxu0 %v972
    %1304 = vmatpush2.bf16.msra.mxu0 %v971
    %1305 = vmatprep.subr.bf16.mxu0 %v964
    %1306 = vmatpush2.bf16.msra.mxu0 %v963
    %1307 = vmatprep.subr.bf16.mxu0 %v956
    %1308 = vmatpush2.bf16.msra.mxu0 %v955
    %1309 = vmatprep.subr.bf16.mxu0 %v948
    %1310 = vmatpush2.bf16.msra.mxu0 %v947
    %1311 = vmatprep.subr.bf16.mxu0 %v940
    %1312 = vmatpush2.bf16.msra.mxu0 %v939
    %1313 = vmatprep.subr.bf16.mxu0 %v932
    %1314 = vmatpush2.bf16.msra.mxu0 %v931
    %1315 = vmatprep.subr.bf16.mxu0 %v924
    %1316 = vmatpush2.bf16.msra.mxu0 %v923
    %1317 = vmatprep.mubr.bf16.mxu0 %v86
    %1318 = vmatmul.mubr.bf16.gmra.mxu0 %v85
    %v1319 = vpop.f32.mrf.mxu0
    %v1320 = vadd.f32 %v1248, %v1319
    %v1321 = vpop.f32.mrf.mxu0
    %v1322 = vadd.f32 %v1252, %v1321
    %v1323 = vpop.f32.mrf.mxu0
    %v1324 = vpop.f32.mrf.mxu0
    %1325 = vdwg.mxu0
    %1326 = vmatprep.subr.bf16.mxu0 %v1044
    %1327 = vmatpush1.bf16.msra.mxu0 %v1043
    %1328 = vmatprep.subr.bf16.mxu0 %v1036
    %1329 = vmatpush1.bf16.msra.mxu0 %v1035
    %1330 = vmatprep.subr.bf16.mxu0 %v1028
    %1331 = vmatpush1.bf16.msra.mxu0 %v1027
    %1332 = vmatprep.subr.bf16.mxu0 %v1020
    %1333 = vmatpush1.bf16.msra.mxu0 %v1019
    %1334 = vmatprep.subr.bf16.mxu0 %v1012
    %1335 = vmatpush1.bf16.msra.mxu0 %v1011
    %1336 = vmatprep.subr.bf16.mxu0 %v1004
    %1337 = vmatpush1.bf16.msra.mxu0 %v1003
    %1338 = vmatprep.subr.bf16.mxu0 %v996
    %1339 = vmatpush1.bf16.msra.mxu0 %v995
    %1340 = vmatprep.subr.bf16.mxu0 %v988
    %1341 = vmatpush1.bf16.msra.mxu0 %v987
    %1342 = vmatprep.subr.bf16.mxu0 %v1108
    %1343 = vmatpush2.bf16.msra.mxu0 %v1107
    %1344 = vmatprep.subr.bf16.mxu0 %v1100
    %1345 = vmatpush2.bf16.msra.mxu0 %v1099
    %1346 = vmatprep.subr.bf16.mxu0 %v1092
    %1347 = vmatpush2.bf16.msra.mxu0 %v1091
    %1348 = vmatprep.subr.bf16.mxu0 %v1084
    %1349 = vmatpush2.bf16.msra.mxu0 %v1083
    %1350 = vmatprep.subr.bf16.mxu0 %v1076
    %1351 = vmatpush2.bf16.msra.mxu0 %v1075
    %1352 = vmatprep.subr.bf16.mxu0 %v1068
    %1353 = vmatpush2.bf16.msra.mxu0 %v1067
    %1354 = vmatprep.subr.bf16.mxu0 %v1060
    %1355 = vmatpush2.bf16.msra.mxu0 %v1059
    %1356 = vmatprep.subr.bf16.mxu0 %v1052
    %1357 = vmatpush2.bf16.msra.mxu0 %v1051
    %1358 = vmatprep.mubr.bf16.mxu0 %v88
    %1359 = vmatmul.mubr.bf16.gmra.mxu0 %v87
    %v1360 = vpop.f32.mrf.mxu0
    %v1361 = vadd.f32 %v1320, %v1360
    %v1362 = vpop.f32.mrf.mxu0
    %v1363 = vadd.f32 %v1322, %v1362
    %v1364 = vpop.f32.mrf.mxu0
    %v1365 = vpop.f32.mrf.mxu0
    %1366 = vdwg.mxu0
    %1367 = vmatprep.subr.bf16.mxu0 %v1172
    %1368 = vmatpush1.bf16.msra.mxu0 %v1171
    %1369 = vmatprep.subr.bf16.mxu0 %v1164
    %1370 = vmatpush1.bf16.msra.mxu0 %v1163
    %1371 = vmatprep.subr.bf16.mxu0 %v1156
    %1372 = vmatpush1.bf16.msra.mxu0 %v1155
    %1373 = vmatprep.subr.bf16.mxu0 %v1148
    %1374 = vmatpush1.bf16.msra.mxu0 %v1147
    %1375 = vmatprep.subr.bf16.mxu0 %v1140
    %1376 = vmatpush1.bf16.msra.mxu0 %v1139
    %1377 = vmatprep.subr.bf16.mxu0 %v1132
    %1378 = vmatpush1.bf16.msra.mxu0 %v1131
    %1379 = vmatprep.subr.bf16.mxu0 %v1124
    %1380 = vmatpush1.bf16.msra.mxu0 %v1123
    %1381 = vmatprep.subr.bf16.mxu0 %v1116
    %1382 = vmatpush1.bf16.msra.mxu0 %v1115
    %1383 = vmatprep.subr.bf16.mxu0 %v1236
    %1384 = vmatpush2.bf16.msra.mxu0 %v1235
    %1385 = vmatprep.subr.bf16.mxu0 %v1228
    %1386 = vmatpush2.bf16.msra.mxu0 %v1227
    %1387 = vmatprep.subr.bf16.mxu0 %v1220
    %1388 = vmatpush2.bf16.msra.mxu0 %v1219
    %1389 = vmatprep.subr.bf16.mxu0 %v1212
    %1390 = vmatpush2.bf16.msra.mxu0 %v1211
    %1391 = vmatprep.subr.bf16.mxu0 %v1204
    %1392 = vmatpush2.bf16.msra.mxu0 %v1203
    %1393 = vmatprep.subr.bf16.mxu0 %v1196
    %1394 = vmatpush2.bf16.msra.mxu0 %v1195
    %1395 = vmatprep.subr.bf16.mxu0 %v1188
    %1396 = vmatpush2.bf16.msra.mxu0 %v1187
    %1397 = vmatprep.subr.bf16.mxu0 %v1180
    %1398 = vmatpush2.bf16.msra.mxu0 %v1179
    %1399 = vmatprep.mubr.bf16.mxu0 %v90
    %1400 = vmatmul.mubr.bf16.gmra.mxu0 %v89
    %v1401 = vpop.f32.mrf.mxu0
    %v1402 = vadd.f32 %v1361, %v1401
    %v1403 = vpop.f32.mrf.mxu0
    %v1404 = vadd.f32 %v1363, %v1403
    %v1405 = vpop.f32.mrf.mxu0
    %v1406 = vpop.f32.mrf.mxu0
    %1407 = vdwg.mxu0
    %1408 = vmatprep.subr.bf16.mxu0 %v918
    %1409 = vmatpush1.bf16.msra.mxu0 %v917
    %1410 = vmatprep.subr.bf16.mxu0 %v910
    %1411 = vmatpush1.bf16.msra.mxu0 %v909
    %1412 = vmatprep.subr.bf16.mxu0 %v902
    %1413 = vmatpush1.bf16.msra.mxu0 %v901
    %1414 = vmatprep.subr.bf16.mxu0 %v894
    %1415 = vmatpush1.bf16.msra.mxu0 %v893
    %1416 = vmatprep.subr.bf16.mxu0 %v886
    %1417 = vmatpush1.bf16.msra.mxu0 %v885
    %1418 = vmatprep.subr.bf16.mxu0 %v878
    %1419 = vmatpush1.bf16.msra.mxu0 %v877
    %1420 = vmatprep.subr.bf16.mxu0 %v870
    %1421 = vmatpush1.bf16.msra.mxu0 %v869
    %1422 = vmatprep.subr.bf16.mxu0 %v862
    %1423 = vmatpush1.bf16.msra.mxu0 %v861
    %1424 = vmatprep.subr.bf16.mxu0 %v982
    %1425 = vmatpush2.bf16.msra.mxu0 %v981
    %1426 = vmatprep.subr.bf16.mxu0 %v974
    %1427 = vmatpush2.bf16.msra.mxu0 %v973
    %1428 = vmatprep.subr.bf16.mxu0 %v966
    %1429 = vmatpush2.bf16.msra.mxu0 %v965
    %1430 = vmatprep.subr.bf16.mxu0 %v958
    %1431 = vmatpush2.bf16.msra.mxu0 %v957
    %1432 = vmatprep.subr.bf16.mxu0 %v950
    %1433 = vmatpush2.bf16.msra.mxu0 %v949
    %1434 = vmatprep.subr.bf16.mxu0 %v942
    %1435 = vmatpush2.bf16.msra.mxu0 %v941
    %1436 = vmatprep.subr.bf16.mxu0 %v934
    %1437 = vmatpush2.bf16.msra.mxu0 %v933
    %1438 = vmatprep.subr.bf16.mxu0 %v926
    %1439 = vmatpush2.bf16.msra.mxu0 %v925
    %1440 = vmatprep.mubr.bf16.mxu0 %v86
    %1441 = vmatmul.mubr.bf16.gmra.mxu0 %v85
    %v1442 = vpop.f32.mrf.mxu0
    %v1443 = vadd.f32 %v1256, %v1442
    %v1444 = vpop.f32.mrf.mxu0
    %v1445 = vadd.f32 %v1260, %v1444
    %v1446 = vpop.f32.mrf.mxu0
    %v1447 = vpop.f32.mrf.mxu0
    %1448 = vdwg.mxu0
    %1449 = vmatprep.subr.bf16.mxu0 %v1046
    %1450 = vmatpush1.bf16.msra.mxu0 %v1045
    %1451 = vmatprep.subr.bf16.mxu0 %v1038
    %1452 = vmatpush1.bf16.msra.mxu0 %v1037
    %1453 = vmatprep.subr.bf16.mxu0 %v1030
    %1454 = vmatpush1.bf16.msra.mxu0 %v1029
    %1455 = vmatprep.subr.bf16.mxu0 %v1022
    %1456 = vmatpush1.bf16.msra.mxu0 %v1021
    %1457 = vmatprep.subr.bf16.mxu0 %v1014
    %1458 = vmatpush1.bf16.msra.mxu0 %v1013
    %1459 = vmatprep.subr.bf16.mxu0 %v1006
    %1460 = vmatpush1.bf16.msra.mxu0 %v1005
    %1461 = vmatprep.subr.bf16.mxu0 %v998
    %1462 = vmatpush1.bf16.msra.mxu0 %v997
    %1463 = vmatprep.subr.bf16.mxu0 %v990
    %1464 = vmatpush1.bf16.msra.mxu0 %v989
    %1465 = vmatprep.subr.bf16.mxu0 %v1110
    %1466 = vmatpush2.bf16.msra.mxu0 %v1109
    %1467 = vmatprep.subr.bf16.mxu0 %v1102
    %1468 = vmatpush2.bf16.msra.mxu0 %v1101
    %1469 = vmatprep.subr.bf16.mxu0 %v1094
    %1470 = vmatpush2.bf16.msra.mxu0 %v1093
    %1471 = vmatprep.subr.bf16.mxu0 %v1086
    %1472 = vmatpush2.bf16.msra.mxu0 %v1085
    %1473 = vmatprep.subr.bf16.mxu0 %v1078
    %1474 = vmatpush2.bf16.msra.mxu0 %v1077
    %1475 = vmatprep.subr.bf16.mxu0 %v1070
    %1476 = vmatpush2.bf16.msra.mxu0 %v1069
    %1477 = vmatprep.subr.bf16.mxu0 %v1062
    %1478 = vmatpush2.bf16.msra.mxu0 %v1061
    %1479 = vmatprep.subr.bf16.mxu0 %v1054
    %1480 = vmatpush2.bf16.msra.mxu0 %v1053
    %1481 = vmatprep.mubr.bf16.mxu0 %v88
    %1482 = vmatmul.mubr.bf16.gmra.mxu0 %v87
    %v1483 = vpop.f32.mrf.mxu0
    %v1484 = vadd.f32 %v1443, %v1483
    %v1485 = vpop.f32.mrf.mxu0
    %v1486 = vadd.f32 %v1445, %v1485
    %v1487 = vpop.f32.mrf.mxu0
    %v1488 = vpop.f32.mrf.mxu0
    %1489 = vdwg.mxu0
    %1490 = vmatprep.subr.bf16.mxu0 %v1174
    %1491 = vmatpush1.bf16.msra.mxu0 %v1173
    %1492 = vmatprep.subr.bf16.mxu0 %v1166
    %1493 = vmatpush1.bf16.msra.mxu0 %v1165
    %1494 = vmatprep.subr.bf16.mxu0 %v1158
    %1495 = vmatpush1.bf16.msra.mxu0 %v1157
    %1496 = vmatprep.subr.bf16.mxu0 %v1150
    %1497 = vmatpush1.bf16.msra.mxu0 %v1149
    %1498 = vmatprep.subr.bf16.mxu0 %v1142
    %1499 = vmatpush1.bf16.msra.mxu0 %v1141
    %1500 = vmatprep.subr.bf16.mxu0 %v1134
    %1501 = vmatpush1.bf16.msra.mxu0 %v1133
    %1502 = vmatprep.subr.bf16.mxu0 %v1126
    %1503 = vmatpush1.bf16.msra.mxu0 %v1125
    %1504 = vmatprep.subr.bf16.mxu0 %v1118
    %1505 = vmatpush1.bf16.msra.mxu0 %v1117
    %1506 = vmatprep.subr.bf16.mxu0 %v1238
    %1507 = vmatpush2.bf16.msra.mxu0 %v1237
    %1508 = vmatprep.subr.bf16.mxu0 %v1230
    %1509 = vmatpush2.bf16.msra.mxu0 %v1229
    %1510 = vmatprep.subr.bf16.mxu0 %v1222
    %1511 = vmatpush2.bf16.msra.mxu0 %v1221
    %1512 = vmatprep.subr.bf16.mxu0 %v1214
    %1513 = vmatpush2.bf16.msra.mxu0 %v1213
    %1514 = vmatprep.subr.bf16.mxu0 %v1206
    %1515 = vmatpush2.bf16.msra.mxu0 %v1205
    %1516 = vmatprep.subr.bf16.mxu0 %v1198
    %1517 = vmatpush2.bf16.msra.mxu0 %v1197
    %1518 = vmatprep.subr.bf16.mxu0 %v1190
    %1519 = vmatpush2.bf16.msra.mxu0 %v1189
    %1520 = vmatprep.subr.bf16.mxu0 %v1182
    %1521 = vmatpush2.bf16.msra.mxu0 %v1181
    %1522 = vmatprep.mubr.bf16.mxu0 %v90
    %1523 = vmatmul.mubr.bf16.gmra.mxu0 %v89
    %v1524 = vpop.f32.mrf.mxu0
    %v1525 = vadd.f32 %v1484, %v1524
    %v1526 = vpop.f32.mrf.mxu0
    %v1527 = vadd.f32 %v1486, %v1526
    %v1528 = vpop.f32.mrf.mxu0
    %v1529 = vpop.f32.mrf.mxu0
    %1530 = vdwg.mxu0
    %1531 = vmatprep.subr.bf16.mxu0 %v920
    %1532 = vmatpush1.bf16.msra.mxu0 %v919
    %1533 = vmatprep.subr.bf16.mxu0 %v912
    %1534 = vmatpush1.bf16.msra.mxu0 %v911
    %1535 = vmatprep.subr.bf16.mxu0 %v904
    %1536 = vmatpush1.bf16.msra.mxu0 %v903
    %1537 = vmatprep.subr.bf16.mxu0 %v896
    %1538 = vmatpush1.bf16.msra.mxu0 %v895
    %1539 = vmatprep.subr.bf16.mxu0 %v888
    %1540 = vmatpush1.bf16.msra.mxu0 %v887
    %1541 = vmatprep.subr.bf16.mxu0 %v880
    %1542 = vmatpush1.bf16.msra.mxu0 %v879
    %1543 = vmatprep.subr.bf16.mxu0 %v872
    %1544 = vmatpush1.bf16.msra.mxu0 %v871
    %1545 = vmatprep.subr.bf16.mxu0 %v864
    %1546 = vmatpush1.bf16.msra.mxu0 %v863
    %1547 = vmatprep.subr.bf16.mxu0 %v984
    %1548 = vmatpush2.bf16.msra.mxu0 %v983
    %1549 = vmatprep.subr.bf16.mxu0 %v976
    %1550 = vmatpush2.bf16.msra.mxu0 %v975
    %1551 = vmatprep.subr.bf16.mxu0 %v968
    %1552 = vmatpush2.bf16.msra.mxu0 %v967
    %1553 = vmatprep.subr.bf16.mxu0 %v960
    %1554 = vmatpush2.bf16.msra.mxu0 %v959
    %1555 = vmatprep.subr.bf16.mxu0 %v952
    %1556 = vmatpush2.bf16.msra.mxu0 %v951
    %1557 = vmatprep.subr.bf16.mxu0 %v944
    %1558 = vmatpush2.bf16.msra.mxu0 %v943
    %1559 = vmatprep.subr.bf16.mxu0 %v936
    %1560 = vmatpush2.bf16.msra.mxu0 %v935
    %1561 = vmatprep.subr.bf16.mxu0 %v928
    %1562 = vmatpush2.bf16.msra.mxu0 %v927
    %1563 = vmatprep.mubr.bf16.mxu0 %v86
    %1564 = vmatmul.mubr.bf16.gmra.mxu0 %v85
    %v1565 = vpop.f32.mrf.mxu0
    %v1566 = vadd.f32 %v1264, %v1565
    %v1567 = vpop.f32.mrf.mxu0
    %v1568 = vadd.f32 %v1268, %v1567
    %v1569 = vpop.f32.mrf.mxu0
    %v1570 = vpop.f32.mrf.mxu0
    %1571 = vdwg.mxu0
    %1572 = vmatprep.subr.bf16.mxu0 %v1048
    %1573 = vmatpush1.bf16.msra.mxu0 %v1047
    %1574 = vmatprep.subr.bf16.mxu0 %v1040
    %1575 = vmatpush1.bf16.msra.mxu0 %v1039
    %1576 = vmatprep.subr.bf16.mxu0 %v1032
    %1577 = vmatpush1.bf16.msra.mxu0 %v1031
    %1578 = vmatprep.subr.bf16.mxu0 %v1024
    %1579 = vmatpush1.bf16.msra.mxu0 %v1023
    %1580 = vmatprep.subr.bf16.mxu0 %v1016
    %1581 = vmatpush1.bf16.msra.mxu0 %v1015
    %1582 = vmatprep.subr.bf16.mxu0 %v1008
    %1583 = vmatpush1.bf16.msra.mxu0 %v1007
    %1584 = vmatprep.subr.bf16.mxu0 %v1000
    %1585 = vmatpush1.bf16.msra.mxu0 %v999
    %1586 = vmatprep.subr.bf16.mxu0 %v992
    %1587 = vmatpush1.bf16.msra.mxu0 %v991
    %1588 = vmatprep.subr.bf16.mxu0 %v1112
    %1589 = vmatpush2.bf16.msra.mxu0 %v1111
    %1590 = vmatprep.subr.bf16.mxu0 %v1104
    %1591 = vmatpush2.bf16.msra.mxu0 %v1103
    %1592 = vmatprep.subr.bf16.mxu0 %v1096
    %1593 = vmatpush2.bf16.msra.mxu0 %v1095
    %1594 = vmatprep.subr.bf16.mxu0 %v1088
    %1595 = vmatpush2.bf16.msra.mxu0 %v1087
    %1596 = vmatprep.subr.bf16.mxu0 %v1080
    %1597 = vmatpush2.bf16.msra.mxu0 %v1079
    %1598 = vmatprep.subr.bf16.mxu0 %v1072
    %1599 = vmatpush2.bf16.msra.mxu0 %v1071
    %1600 = vmatprep.subr.bf16.mxu0 %v1064
    %1601 = vmatpush2.bf16.msra.mxu0 %v1063
    %1602 = vmatprep.subr.bf16.mxu0 %v1056
    %1603 = vmatpush2.bf16.msra.mxu0 %v1055
    %1604 = vmatprep.mubr.bf16.mxu0 %v88
    %1605 = vmatmul.mubr.bf16.gmra.mxu0 %v87
    %v1606 = vpop.f32.mrf.mxu0
    %v1607 = vadd.f32 %v1566, %v1606
    %v1608 = vpop.f32.mrf.mxu0
    %v1609 = vadd.f32 %v1568, %v1608
    %v1610 = vpop.f32.mrf.mxu0
    %v1611 = vpop.f32.mrf.mxu0
    %1612 = vdwg.mxu0
    %1613 = vmatprep.subr.bf16.mxu0 %v1176
    %1614 = vmatpush1.bf16.msra.mxu0 %v1175
    %1615 = vmatprep.subr.bf16.mxu0 %v1168
    %1616 = vmatpush1.bf16.msra.mxu0 %v1167
    %1617 = vmatprep.subr.bf16.mxu0 %v1160
    %1618 = vmatpush1.bf16.msra.mxu0 %v1159
    %1619 = vmatprep.subr.bf16.mxu0 %v1152
    %1620 = vmatpush1.bf16.msra.mxu0 %v1151
    %1621 = vmatprep.subr.bf16.mxu0 %v1144
    %1622 = vmatpush1.bf16.msra.mxu0 %v1143
    %1623 = vmatprep.subr.bf16.mxu0 %v1136
    %1624 = vmatpush1.bf16.msra.mxu0 %v1135
    %1625 = vmatprep.subr.bf16.mxu0 %v1128
    %1626 = vmatpush1.bf16.msra.mxu0 %v1127
    %1627 = vmatprep.subr.bf16.mxu0 %v1120
    %1628 = vmatpush1.bf16.msra.mxu0 %v1119
    %1629 = vmatprep.subr.bf16.mxu0 %v1240
    %1630 = vmatpush2.bf16.msra.mxu0 %v1239
    %1631 = vmatprep.subr.bf16.mxu0 %v1232
    %1632 = vmatpush2.bf16.msra.mxu0 %v1231
    %1633 = vmatprep.subr.bf16.mxu0 %v1224
    %1634 = vmatpush2.bf16.msra.mxu0 %v1223
    %1635 = vmatprep.subr.bf16.mxu0 %v1216
    %1636 = vmatpush2.bf16.msra.mxu0 %v1215
    %1637 = vmatprep.subr.bf16.mxu0 %v1208
    %1638 = vmatpush2.bf16.msra.mxu0 %v1207
    %1639 = vmatprep.subr.bf16.mxu0 %v1200
    %1640 = vmatpush2.bf16.msra.mxu0 %v1199
    %1641 = vmatprep.subr.bf16.mxu0 %v1192
    %1642 = vmatpush2.bf16.msra.mxu0 %v1191
    %1643 = vmatprep.subr.bf16.mxu0 %v1184
    %1644 = vmatpush2.bf16.msra.mxu0 %v1183
    %1645 = vmatprep.mubr.bf16.mxu0 %v90
    %1646 = vmatmul.mubr.bf16.gmra.mxu0 %v89
    %v1647 = vpop.f32.mrf.mxu0
    %v1648 = vadd.f32 %v1607, %v1647
    %v1649 = vpop.f32.mrf.mxu0
    %v1650 = vadd.f32 %v1609, %v1649
    %v1651 = vpop.f32.mrf.mxu0
    %v1652 = vpop.f32.mrf.mxu0
    %1653 = vdwg.mxu0
    %1654 = vmatprep.subr.bf16.mxu0 %v922
    %1655 = vmatpush1.bf16.msra.mxu0 %v921
    %1656 = vmatprep.subr.bf16.mxu0 %v914
    %1657 = vmatpush1.bf16.msra.mxu0 %v913
    %1658 = vmatprep.subr.bf16.mxu0 %v906
    %1659 = vmatpush1.bf16.msra.mxu0 %v905
    %1660 = vmatprep.subr.bf16.mxu0 %v898
    %1661 = vmatpush1.bf16.msra.mxu0 %v897
    %1662 = vmatprep.subr.bf16.mxu0 %v890
    %1663 = vmatpush1.bf16.msra.mxu0 %v889
    %1664 = vmatprep.subr.bf16.mxu0 %v882
    %1665 = vmatpush1.bf16.msra.mxu0 %v881
    %1666 = vmatprep.subr.bf16.mxu0 %v874
    %1667 = vmatpush1.bf16.msra.mxu0 %v873
    %1668 = vmatprep.subr.bf16.mxu0 %v866
    %1669 = vmatpush1.bf16.msra.mxu0 %v865
    %1670 = vmatprep.subr.bf16.mxu0 %v986
    %1671 = vmatpush2.bf16.msra.mxu0 %v985
    %1672 = vmatprep.subr.bf16.mxu0 %v978
    %1673 = vmatpush2.bf16.msra.mxu0 %v977
    %1674 = vmatprep.subr.bf16.mxu0 %v970
    %1675 = vmatpush2.bf16.msra.mxu0 %v969
    %1676 = vmatprep.subr.bf16.mxu0 %v962
    %1677 = vmatpush2.bf16.msra.mxu0 %v961
    %1678 = vmatprep.subr.bf16.mxu0 %v954
    %1679 = vmatpush2.bf16.msra.mxu0 %v953
    %1680 = vmatprep.subr.bf16.mxu0 %v946
    %1681 = vmatpush2.bf16.msra.mxu0 %v945
    %1682 = vmatprep.subr.bf16.mxu0 %v938
    %1683 = vmatpush2.bf16.msra.mxu0 %v937
    %1684 = vmatprep.subr.bf16.mxu0 %v930
    %1685 = vmatpush2.bf16.msra.mxu0 %v929
    %1686 = vmatprep.mubr.bf16.mxu0 %v86
    %1687 = vmatmul.mubr.bf16.gmra.mxu0 %v85
    %v1688 = vpop.f32.mrf.mxu0
    %v1689 = vadd.f32 %v1272, %v1688
    %v1690 = vpop.f32.mrf.mxu0
    %v1691 = vadd.f32 %v1276, %v1690
    %v1692 = vpop.f32.mrf.mxu0
    %v1693 = vpop.f32.mrf.mxu0
    %1694 = vdwg.mxu0
    %1695 = vmatprep.subr.bf16.mxu0 %v1050
    %1696 = vmatpush1.bf16.msra.mxu0 %v1049
    %1697 = vmatprep.subr.bf16.mxu0 %v1042
    %1698 = vmatpush1.bf16.msra.mxu0 %v1041
    %1699 = vmatprep.subr.bf16.mxu0 %v1034
    %1700 = vmatpush1.bf16.msra.mxu0 %v1033
    %1701 = vmatprep.subr.bf16.mxu0 %v1026
    %1702 = vmatpush1.bf16.msra.mxu0 %v1025
    %1703 = vmatprep.subr.bf16.mxu0 %v1018
    %1704 = vmatpush1.bf16.msra.mxu0 %v1017
    %1705 = vmatprep.subr.bf16.mxu0 %v1010
    %1706 = vmatpush1.bf16.msra.mxu0 %v1009
    %1707 = vmatprep.subr.bf16.mxu0 %v1002
    %1708 = vmatpush1.bf16.msra.mxu0 %v1001
    %1709 = vmatprep.subr.bf16.mxu0 %v994
    %1710 = vmatpush1.bf16.msra.mxu0 %v993
    %1711 = vmatprep.subr.bf16.mxu0 %v1114
    %1712 = vmatpush2.bf16.msra.mxu0 %v1113
    %1713 = vmatprep.subr.bf16.mxu0 %v1106
    %1714 = vmatpush2.bf16.msra.mxu0 %v1105
    %1715 = vmatprep.subr.bf16.mxu0 %v1098
    %1716 = vmatpush2.bf16.msra.mxu0 %v1097
    %1717 = vmatprep.subr.bf16.mxu0 %v1090
    %1718 = vmatpush2.bf16.msra.mxu0 %v1089
    %1719 = vmatprep.subr.bf16.mxu0 %v1082
    %1720 = vmatpush2.bf16.msra.mxu0 %v1081
    %1721 = vmatprep.subr.bf16.mxu0 %v1074
    %1722 = vmatpush2.bf16.msra.mxu0 %v1073
    %1723 = vmatprep.subr.bf16.mxu0 %v1066
    %1724 = vmatpush2.bf16.msra.mxu0 %v1065
    %1725 = vmatprep.subr.bf16.mxu0 %v1058
    %1726 = vmatpush2.bf16.msra.mxu0 %v1057
    %1727 = vmatprep.mubr.bf16.mxu0 %v88
    %1728 = vmatmul.mubr.bf16.gmra.mxu0 %v87
    %v1729 = vpop.f32.mrf.mxu0
    %v1730 = vadd.f32 %v1689, %v1729
    %v1731 = vpop.f32.mrf.mxu0
    %v1732 = vadd.f32 %v1691, %v1731
    %v1733 = vpop.f32.mrf.mxu0
    %v1734 = vpop.f32.mrf.mxu0
    %1735 = vdwg.mxu0
    %1736 = vmatprep.subr.bf16.mxu0 %v1178
    %1737 = vmatpush1.bf16.msra.mxu0 %v1177
    %1738 = vmatprep.subr.bf16.mxu0 %v1170
    %1739 = vmatpush1.bf16.msra.mxu0 %v1169
    %1740 = vmatprep.subr.bf16.mxu0 %v1162
    %1741 = vmatpush1.bf16.msra.mxu0 %v1161
    %1742 = vmatprep.subr.bf16.mxu0 %v1154
    %1743 = vmatpush1.bf16.msra.mxu0 %v1153
    %1744 = vmatprep.subr.bf16.mxu0 %v1146
    %1745 = vmatpush1.bf16.msra.mxu0 %v1145
    %1746 = vmatprep.subr.bf16.mxu0 %v1138
    %1747 = vmatpush1.bf16.msra.mxu0 %v1137
    %1748 = vmatprep.subr.bf16.mxu0 %v1130
    %1749 = vmatpush1.bf16.msra.mxu0 %v1129
    %1750 = vmatprep.subr.bf16.mxu0 %v1122
    %1751 = vmatpush1.bf16.msra.mxu0 %v1121
    %1752 = vmatprep.subr.bf16.mxu0 %v1242
    %1753 = vmatpush2.bf16.msra.mxu0 %v1241
    %1754 = vmatprep.subr.bf16.mxu0 %v1234
    %1755 = vmatpush2.bf16.msra.mxu0 %v1233
    %1756 = vmatprep.subr.bf16.mxu0 %v1226
    %1757 = vmatpush2.bf16.msra.mxu0 %v1225
    %1758 = vmatprep.subr.bf16.mxu0 %v1218
    %1759 = vmatpush2.bf16.msra.mxu0 %v1217
    %1760 = vmatprep.subr.bf16.mxu0 %v1210
    %1761 = vmatpush2.bf16.msra.mxu0 %v1209
    %1762 = vmatprep.subr.bf16.mxu0 %v1202
    %1763 = vmatpush2.bf16.msra.mxu0 %v1201
    %1764 = vmatprep.subr.bf16.mxu0 %v1194
    %1765 = vmatpush2.bf16.msra.mxu0 %v1193
    %1766 = vmatprep.subr.bf16.mxu0 %v1186
    %1767 = vmatpush2.bf16.msra.mxu0 %v1185
    %1768 = vmatprep.mubr.bf16.mxu0 %v90
    %1769 = vmatmul.mubr.bf16.gmra.mxu0 %v89
    %v1770 = vpop.f32.mrf.mxu0
    %v1771 = vadd.f32 %v1730, %v1770
    %v1772 = vpop.f32.mrf.mxu0
    %v1773 = vadd.f32 %v1732, %v1772
    %v1774 = vpop.f32.mrf.mxu0
    %v1775 = vpop.f32.mrf.mxu0
    %1776 = vdwg.mxu0
    %v1777 = vmul.f32 %v1402, %v1402
    %v1778 = vmul.f32 %v1404, %v1404
    %v1779 = vmul.f32 %v1525, %v1525
    %v1780 = vmul.f32 %v1527, %v1527
    %v1781 = vmul.f32 %v1648, %v1648
    %v1782 = vmul.f32 %v1650, %v1650
    %v1783 = vmul.f32 %v1771, %v1771
    %v1784 = vmul.f32 %v1773, %v1773
    %v1785 = vadd.f32 %v1777, %v1778
    %v1786 = vadd.f32 %v1785, %v1779
    %v1787 = vadd.f32 %v1786, %v1780
    %v1788 = vadd.f32 %v1787, %v1781
    %v1789 = vadd.f32 %v1788, %v1782
    %v1790 = vadd.f32 %v1789, %v1783
    %v1791 = vadd.f32 %v1790, %v1784
    %1792 = vadd.xlane.f32.xlu0 %v1791
    %v1793 = vpop.xlane.xlu0 %1792
    %v1794 = vrsqrt.pop %v1793
    %v1795 = vmul.f32 %v1402, %v1794
    %v1796 = vmul.f32 %v1404, %v1794
    %v1797 = vmul.f32 %v1525, %v1794
    %v1798 = vmul.f32 %v1527, %v1794
    %v1799 = vmul.f32 %v1648, %v1794
    %v1800 = vmul.f32 %v1650, %v1794
    %v1801 = vmul.f32 %v1771, %v1794
    %v1802 = vmul.f32 %v1773, %v1794
    %v1803 = vld [vmem:[#allocation6] sm:$0xff]
    %v1804 = vld [vmem:[#allocation6 + $0x8] sm:$0xff]
    %v1805 = vld [vmem:[#allocation6 + $0x10] sm:$0xff]
    %v1806 = vld [vmem:[#allocation6 + $0x18] sm:$0xff]
    %v1807 = vld [vmem:[#allocation6 + $0x20] sm:$0xff]
    %v1808 = vld [vmem:[#allocation6 + $0x28] sm:$0xff]
    %v1809 = vld [vmem:[#allocation6 + $0x30] sm:$0xff]
    %v1810 = vld [vmem:[#allocation6 + $0x38] sm:$0xff]
    %v1811 = vmul.f32 %v1803, %v1803
    %v1812 = vmul.f32 %v1804, %v1804
    %v1813 = vmul.f32 %v1805, %v1805
    %v1814 = vmul.f32 %v1806, %v1806
    %v1815 = vmul.f32 %v1807, %v1807
    %v1816 = vmul.f32 %v1808, %v1808
    %v1817 = vmul.f32 %v1809, %v1809
    %v1818 = vmul.f32 %v1810, %v1810
    %v1819 = vadd.f32 %v1811, %v1812
    %v1820 = vadd.f32 %v1819, %v1813
    %v1821 = vadd.f32 %v1820, %v1814
    %v1822 = vadd.f32 %v1821, %v1815
    %v1823 = vadd.f32 %v1822, %v1816
    %v1824 = vadd.f32 %v1823, %v1817
    %v1825 = vadd.f32 %v1824, %v1818
    %1826 = vadd.xlane.f32.xlu0 %v1825
    %v1827 = vpop.xlane.xlu0 %1826
    %v1828 = vrsqrt.pop %v1827
    %v1829 = vmul.f32 %v1803, %v1828
    %v1830 = vmul.f32 %v1804, %v1828
    %v1831 = vmul.f32 %v1805, %v1828
    %v1832 = vmul.f32 %v1806, %v1828
    %v1833 = vmul.f32 %v1807, %v1828
    %v1834 = vmul.f32 %v1808, %v1828
    %v1835 = vmul.f32 %v1809, %v1828
    %v1836 = vmul.f32 %v1810, %v1828
    %v1837 = vstv %s78
    %v1838 = vmul.f32 %v1795, %v1837
    %v1839 = vmul.f32 %v1796, %v1837
    %v1840 = vmul.f32 %v1797, %v1837
    %v1841 = vmul.f32 %v1798, %v1837
    %v1842 = vmul.f32 %v1799, %v1837
    %v1843 = vmul.f32 %v1800, %v1837
    %v1844 = vmul.f32 %v1801, %v1837
    %v1845 = vmul.f32 %v1802, %v1837
    %v1846 = vpack.c.bf16 %v1838, %v1838
    %v1847 = vpack.c.bf16 %v1839, %v1839
    %v1848 = vpack.c.bf16 %v1840, %v1840
    %v1849 = vpack.c.bf16 %v1841, %v1841
    %v1850 = vpack.c.bf16 %v1842, %v1842
    %v1851 = vpack.c.bf16 %v1843, %v1843
    %v1852 = vpack.c.bf16 %v1844, %v1844
    %v1853 = vpack.c.bf16 %v1845, %v1845
    %v1854 = vpack.c.bf16 %v1829, %v1829
    %v1855 = vpack.c.bf16 %v1830, %v1830
    %v1856 = vpack.c.bf16 %v1831, %v1831
    %v1857 = vpack.c.bf16 %v1832, %v1832
    %v1858 = vpack.c.bf16 %v1833, %v1833
    %v1859 = vpack.c.bf16 %v1834, %v1834
    %v1860 = vpack.c.bf16 %v1835, %v1835
    %v1861 = vpack.c.bf16 %v1836, %v1836
    %v1870 = vunpack.c.l.b16 %v1846
    %v1871 = vunpack.c.l.b16 %v1847
    %v1872 = vunpack.c.l.b16 %v1848
    %v1873 = vunpack.c.l.b16 %v1849
    %v1874 = vunpack.c.l.b16 %v1850
    %v1875 = vunpack.c.l.b16 %v1851
    %v1876 = vunpack.c.l.b16 %v1852
    %v1877 = vunpack.c.l.b16 %v1853
    %v1878 = vpack.c.b16 %v1871, %v1870
    %v1879 = vpack.c.b16 %v1873, %v1872
    %v1880 = vpack.c.b16 %v1875, %v1874
    %v1881 = vpack.c.b16 %v1877, %v1876
    %1886 = vst [vmem:[#allocation11] sm:$0xff] %v1878
    %1887 = vst [vmem:[#allocation11 + $0x8] sm:$0xff] %v1879
    %1888 = vst [vmem:[#allocation11 + $0x10] sm:$0xff] %v1880
    %1889 = vst [vmem:[#allocation11 + $0x18] sm:$0xff] %v1881
    %v1898 = vunpack.c.l.b16 %v1854
    %v1899 = vunpack.c.l.b16 %v1855
    %v1900 = vunpack.c.l.b16 %v1856
    %v1901 = vunpack.c.l.b16 %v1857
    %v1902 = vunpack.c.l.b16 %v1858
    %v1903 = vunpack.c.l.b16 %v1859
    %v1904 = vunpack.c.l.b16 %v1860
    %v1905 = vunpack.c.l.b16 %v1861
    %v1906 = vpack.c.b16 %v1899, %v1898
    %v1907 = vpack.c.b16 %v1901, %v1900
    %v1908 = vpack.c.b16 %v1903, %v1902
    %v1909 = vpack.c.b16 %v1905, %v1904
    %1914 = vst [vmem:[#allocation12] sm:$0xff] %v1906
    %1915 = vst [vmem:[#allocation12 + $0x8] sm:$0xff] %v1907
    %1916 = vst [vmem:[#allocation12 + $0x10] sm:$0xff] %v1908
    %1917 = vst [vmem:[#allocation12 + $0x18] sm:$0xff] %v1909
    %1918 = vmatprep.subr.bf16.mxu0 0
    %1919 = vmatpush1.bf16.xpose.msra.mxu0 0
    %1920 = vmatprep.subr.bf16.mxu0 0
    %1921 = vmatpush1.bf16.xpose.msra.mxu0 0
    %1922 = vmatprep.subr.bf16.mxu0 0
    %1923 = vmatpush1.bf16.xpose.msra.mxu0 0
    %1924 = vmatprep.subr.bf16.mxu0 0
    %1925 = vmatpush1.bf16.xpose.msra.mxu0 0
    %1926 = vmatprep.subr.bf16.mxu0 0
    %1927 = vmatpush1.bf16.xpose.msra.mxu0 0
    %1928 = vmatprep.subr.bf16.mxu0 0
    %1929 = vmatpush1.bf16.xpose.msra.mxu0 0
    %1930 = vmatprep.subr.bf16.mxu0 0
    %1931 = vmatpush1.bf16.xpose.msra.mxu0 0
    %1932 = vmatprep.subr.bf16.mxu0 %v1855
    %1933 = vmatpush1.bf16.xpose.msra.mxu0 %v1854
    %1934 = vmatprep.subr.bf16.mxu0 0
    %1935 = vmatpush2.bf16.xpose.msra.mxu0 0
    %1936 = vmatprep.subr.bf16.mxu0 0
    %1937 = vmatpush2.bf16.xpose.msra.mxu0 0
    %1938 = vmatprep.subr.bf16.mxu0 0
    %1939 = vmatpush2.bf16.xpose.msra.mxu0 0
    %1940 = vmatprep.subr.bf16.mxu0 0
    %1941 = vmatpush2.bf16.xpose.msra.mxu0 0
    %1942 = vmatprep.subr.bf16.mxu0 0
    %1943 = vmatpush2.bf16.xpose.msra.mxu0 0
    %1944 = vmatprep.subr.bf16.mxu0 0
    %1945 = vmatpush2.bf16.xpose.msra.mxu0 0
    %1946 = vmatprep.subr.bf16.mxu0 0
    %1947 = vmatpush2.bf16.xpose.msra.mxu0 0
    %1948 = vmatprep.subr.bf16.mxu0 0
    %1949 = vmatpush2.bf16.xpose.msra.mxu0 0
    %1950 = vmatprep.mubr.bf16.mxu0 %v1847
    %1951 = vmatmul.mubr.bf16.gmra.mxu0 %v1846
    %v1952 = vpop.f32.mrf.mxu0
    %v1953 = vadd.f32 0.0, %v1952
    %v1954 = vpop.f32.mrf.mxu0
    %v1955 = vpop.f32.mrf.mxu0
    %v1956 = vpop.f32.mrf.mxu0
    %1957 = vdwg.mxu0
    %1958 = vmatprep.subr.bf16.mxu0 0
    %1959 = vmatpush1.bf16.xpose.msra.mxu0 0
    %1960 = vmatprep.subr.bf16.mxu0 0
    %1961 = vmatpush1.bf16.xpose.msra.mxu0 0
    %1962 = vmatprep.subr.bf16.mxu0 0
    %1963 = vmatpush1.bf16.xpose.msra.mxu0 0
    %1964 = vmatprep.subr.bf16.mxu0 0
    %1965 = vmatpush1.bf16.xpose.msra.mxu0 0
    %1966 = vmatprep.subr.bf16.mxu0 0
    %1967 = vmatpush1.bf16.xpose.msra.mxu0 0
    %1968 = vmatprep.subr.bf16.mxu0 0
    %1969 = vmatpush1.bf16.xpose.msra.mxu0 0
    %1970 = vmatprep.subr.bf16.mxu0 0
    %1971 = vmatpush1.bf16.xpose.msra.mxu0 0
    %1972 = vmatprep.subr.bf16.mxu0 %v1857
    %1973 = vmatpush1.bf16.xpose.msra.mxu0 %v1856
    %1974 = vmatprep.subr.bf16.mxu0 0
    %1975 = vmatpush2.bf16.xpose.msra.mxu0 0
    %1976 = vmatprep.subr.bf16.mxu0 0
    %1977 = vmatpush2.bf16.xpose.msra.mxu0 0
    %1978 = vmatprep.subr.bf16.mxu0 0
    %1979 = vmatpush2.bf16.xpose.msra.mxu0 0
    %1980 = vmatprep.subr.bf16.mxu0 0
    %1981 = vmatpush2.bf16.xpose.msra.mxu0 0
    %1982 = vmatprep.subr.bf16.mxu0 0
    %1983 = vmatpush2.bf16.xpose.msra.mxu0 0
    %1984 = vmatprep.subr.bf16.mxu0 0
    %1985 = vmatpush2.bf16.xpose.msra.mxu0 0
    %1986 = vmatprep.subr.bf16.mxu0 0
    %1987 = vmatpush2.bf16.xpose.msra.mxu0 0
    %1988 = vmatprep.subr.bf16.mxu0 0
    %1989 = vmatpush2.bf16.xpose.msra.mxu0 0
    %1990 = vmatprep.mubr.bf16.mxu0 %v1849
    %1991 = vmatmul.mubr.bf16.gmra.mxu0 %v1848
    %v1992 = vpop.f32.mrf.mxu0
    %v1993 = vadd.f32 %v1953, %v1992
    %v1994 = vpop.f32.mrf.mxu0
    %v1995 = vpop.f32.mrf.mxu0
    %v1996 = vpop.f32.mrf.mxu0
    %1997 = vdwg.mxu0
    %1998 = vmatprep.subr.bf16.mxu0 0
    %1999 = vmatpush1.bf16.xpose.msra.mxu0 0
    %2000 = vmatprep.subr.bf16.mxu0 0
    %2001 = vmatpush1.bf16.xpose.msra.mxu0 0
    %2002 = vmatprep.subr.bf16.mxu0 0
    %2003 = vmatpush1.bf16.xpose.msra.mxu0 0
    %2004 = vmatprep.subr.bf16.mxu0 0
    %2005 = vmatpush1.bf16.xpose.msra.mxu0 0
    %2006 = vmatprep.subr.bf16.mxu0 0
    %2007 = vmatpush1.bf16.xpose.msra.mxu0 0
    %2008 = vmatprep.subr.bf16.mxu0 0
    %2009 = vmatpush1.bf16.xpose.msra.mxu0 0
    %2010 = vmatprep.subr.bf16.mxu0 0
    %2011 = vmatpush1.bf16.xpose.msra.mxu0 0
    %2012 = vmatprep.subr.bf16.mxu0 %v1859
    %2013 = vmatpush1.bf16.xpose.msra.mxu0 %v1858
    %2014 = vmatprep.subr.bf16.mxu0 0
    %2015 = vmatpush2.bf16.xpose.msra.mxu0 0
    %2016 = vmatprep.subr.bf16.mxu0 0
    %2017 = vmatpush2.bf16.xpose.msra.mxu0 0
    %2018 = vmatprep.subr.bf16.mxu0 0
    %2019 = vmatpush2.bf16.xpose.msra.mxu0 0
    %2020 = vmatprep.subr.bf16.mxu0 0
    %2021 = vmatpush2.bf16.xpose.msra.mxu0 0
    %2022 = vmatprep.subr.bf16.mxu0 0
    %2023 = vmatpush2.bf16.xpose.msra.mxu0 0
    %2024 = vmatprep.subr.bf16.mxu0 0
    %2025 = vmatpush2.bf16.xpose.msra.mxu0 0
    %2026 = vmatprep.subr.bf16.mxu0 0
    %2027 = vmatpush2.bf16.xpose.msra.mxu0 0
    %2028 = vmatprep.subr.bf16.mxu0 0
    %2029 = vmatpush2.bf16.xpose.msra.mxu0 0
    %2030 = vmatprep.mubr.bf16.mxu0 %v1851
    %2031 = vmatmul.mubr.bf16.gmra.mxu0 %v1850
    %v2032 = vpop.f32.mrf.mxu0
    %v2033 = vadd.f32 %v1993, %v2032
    %v2034 = vpop.f32.mrf.mxu0
    %v2035 = vpop.f32.mrf.mxu0
    %v2036 = vpop.f32.mrf.mxu0
    %2037 = vdwg.mxu0
    %2038 = vmatprep.subr.bf16.mxu0 0
    %2039 = vmatpush1.bf16.xpose.msra.mxu0 0
    %2040 = vmatprep.subr.bf16.mxu0 0
    %2041 = vmatpush1.bf16.xpose.msra.mxu0 0
    %2042 = vmatprep.subr.bf16.mxu0 0
    %2043 = vmatpush1.bf16.xpose.msra.mxu0 0
    %2044 = vmatprep.subr.bf16.mxu0 0
    %2045 = vmatpush1.bf16.xpose.msra.mxu0 0
    %2046 = vmatprep.subr.bf16.mxu0 0
    %2047 = vmatpush1.bf16.xpose.msra.mxu0 0
    %2048 = vmatprep.subr.bf16.mxu0 0
    %2049 = vmatpush1.bf16.xpose.msra.mxu0 0
    %2050 = vmatprep.subr.bf16.mxu0 0
    %2051 = vmatpush1.bf16.xpose.msra.mxu0 0
    %2052 = vmatprep.subr.bf16.mxu0 %v1861
    %2053 = vmatpush1.bf16.xpose.msra.mxu0 %v1860
    %2054 = vmatprep.subr.bf16.mxu0 0
    %2055 = vmatpush2.bf16.xpose.msra.mxu0 0
    %2056 = vmatprep.subr.bf16.mxu0 0
    %2057 = vmatpush2.bf16.xpose.msra.mxu0 0
    %2058 = vmatprep.subr.bf16.mxu0 0
    %2059 = vmatpush2.bf16.xpose.msra.mxu0 0
    %2060 = vmatprep.subr.bf16.mxu0 0
    %2061 = vmatpush2.bf16.xpose.msra.mxu0 0
    %2062 = vmatprep.subr.bf16.mxu0 0
    %2063 = vmatpush2.bf16.xpose.msra.mxu0 0
    %2064 = vmatprep.subr.bf16.mxu0 0
    %2065 = vmatpush2.bf16.xpose.msra.mxu0 0
    %2066 = vmatprep.subr.bf16.mxu0 0
    %2067 = vmatpush2.bf16.xpose.msra.mxu0 0
    %2068 = vmatprep.subr.bf16.mxu0 0
    %2069 = vmatpush2.bf16.xpose.msra.mxu0 0
    %2070 = vmatprep.mubr.bf16.mxu0 %v1853
    %2071 = vmatmul.mubr.bf16.gmra.mxu0 %v1852
    %v2072 = vpop.f32.mrf.mxu0
    %v2073 = vadd.f32 %v2033, %v2072
    %v2074 = vpop.f32.mrf.mxu0
    %v2075 = vpop.f32.mrf.mxu0
    %v2076 = vpop.f32.mrf.mxu0
    %2077 = vdwg.mxu0
    %v2078 = vlaneseq
    %v2079 = vshrl.u32 %v2078, 7
    %v2080 = vlaneseq
    %v2081 = vand.u32 %v2080, 127
    %vm2082 = vcmp.eq.s32.totalorder %v2079, %v2081
    %v2083 = vsel %vm2082, %v2073, 0.0
    %vm2084 = vcmask 64512
    %v2085 = vsel %vm2084, %v2083, 0.0
    %2086 = vadd.xlane.f32.xlu0 %v2085
    %v2087 = vpop.xlane.xlu0 %2086
    %vm2088 = vcmask 7168
    %2089 = vst.msk [vmem:[%s7] sm:$0xff] %vm2088, %v2087
    %v2090 = vsel %vm2084, %v2073, -inf
    %2091 = vmax.xlane.f32.xlu0 %v2090
    %v2092 = vpop.xlane.xlu0 %2091
    %2093 = vst.msk [vmem:[%s8] sm:$0xff] %vm2088, %v2092
    %v2094 = vsub.f32 %v2073, %v2092
    %v2095 = vmul.f32 %v2094, 1.442695
    %v2096 = vpow.pop %v2095
    %v2097 = vsel %vm2084, %v2096, 0.0
    %2098 = vadd.xlane.f32.xlu0 %v2097
    %v2099 = vpop.xlane.xlu0 %2098
    %2100 = vst.msk [vmem:[%s9] sm:$0xff] %vm2088, %v2099
    // Predicated region
    $region38: #{tpu_custom_call.1} parent=1 // pred_check
      _
    $region39: #{tpu_custom_call.1} parent=1 // pred_check_branch
      %2102 = sbr.rel (0) target = $region41
    $region40: #{tpu_custom_call.1} parent=1 // pred_region
      %s2104 = ssub.s32 512, 512
      %2105 = vsyncadd [#allocation5], %s2104
      %s2107 = sshll.u32 [#allocation11], 4
      %s2108 = int_to_ptr.vmem [resolvable:$true] %s2107
      %2110 = dma.vmem_to_hbm [thread:$0]  %s2108, 512, %s5, [#allocation5]
    $region41: #{tpu_custom_call.1} parent=1 // pred_fallthru
      _
    // Predicated region
    $region42: #{tpu_custom_call.1} parent=1 // pred_check
      _
    $region43: #{tpu_custom_call.1} parent=1 // pred_check_branch
      %2112 = sbr.rel (0) target = $region45
    $region44: #{tpu_custom_call.1} parent=1 // pred_region
      %s2114 = ssub.s32 512, 512
      %2115 = vsyncadd [#allocation13], %s2114
      %s2117 = sshll.u32 [#allocation12], 4
      %s2118 = int_to_ptr.vmem [resolvable:$true] %s2117
      %2120 = dma.vmem_to_hbm [thread:$0]  %s2118, 512, %s6, [#allocation13]
    $region45: #{tpu_custom_call.1} parent=1 // pred_fallthru
      _
    // Predicated region
    $region46: #{tpu_custom_call.1} parent=1 // pred_check
      _
    $region47: #{tpu_custom_call.1} parent=1 // pred_check_branch
      %2122 = sbr.rel (0) target = $region49
    $region48: #{tpu_custom_call.1} parent=1 // pred_region
      _
    $region49: #{tpu_custom_call.1} parent=1 // pred_fallthru
      _
    // Predicated region
    $region50: #{tpu_custom_call.1} parent=1 // pred_check
      _
    $region51: #{tpu_custom_call.1} parent=1 // pred_check_branch
      %2124 = sbr.rel (0) target = $region53
    $region52: #{tpu_custom_call.1} parent=1 // pred_region
      _
    $region53: #{tpu_custom_call.1} parent=1 // pred_fallthru
      _
    // Predicated region
    $region54: #{tpu_custom_call.1} parent=1 // pred_check
      _
    $region55: #{tpu_custom_call.1} parent=1 // pred_check_branch
      %2126 = sbr.rel (0) target = $region57
    $region56: #{tpu_custom_call.1} parent=1 // pred_region
      _
    $region57: #{tpu_custom_call.1} parent=1 // pred_fallthru
      _
    // Predicated region
    $region58: #{tpu_custom_call.1} parent=1 // pred_check
      _
    $region59: #{tpu_custom_call.1} parent=1 // pred_check_branch
      %2128 = sbr.rel (0) target = $region61
    $region60: #{tpu_custom_call.1} parent=1 // pred_region
      %2129 = dma.done [#allocation5], 512
    $region61: #{tpu_custom_call.1} parent=1 // pred_fallthru
      _
    // Predicated region
    $region62: #{tpu_custom_call.1} parent=1 // pred_check
      _
    $region63: #{tpu_custom_call.1} parent=1 // pred_check_branch
      %2131 = sbr.rel (0) target = $region65
    $region64: #{tpu_custom_call.1} parent=1 // pred_region
      %2132 = dma.done [#allocation13], 512
    $region65: #{tpu_custom_call.1} parent=1 // pred_fallthru
      _
    // Predicated region
    $region66: #{tpu_custom_call.1} parent=1 // pred_check
      _
    $region67: #{tpu_custom_call.1} parent=1 // pred_check_branch
      %2134 = sbr.rel (0) target = $region69
    $region68: #{tpu_custom_call.1} parent=1 // pred_region
      _
    $region69: #{tpu_custom_call.1} parent=1 // pred_fallthru
      _
    // Predicated region
    $region70: #{tpu_custom_call.1} parent=1 // pred_check
      _
    $region71: #{tpu_custom_call.1} parent=1 // pred_check_branch
      %2136 = sbr.rel (0) target = $region73
    $region72: #{tpu_custom_call.1} parent=1 // pred_region
      _
    $region73: #{tpu_custom_call.1} parent=1 // pred_fallthru
      _
    // Predicated region
    $region74: #{tpu_custom_call.1} parent=1 // pred_check
      _
    $region75: #{tpu_custom_call.1} parent=1 // pred_check_branch
      %2138 = sbr.rel (0) target = $region77
    $region76: #{tpu_custom_call.1} parent=1 // pred_region
      _
    $region77: #{tpu_custom_call.1} parent=1 // pred_fallthru
      _
    %2139 = vsyncpa [#allocation4], 1
    %2140 = vsyncpa [#allocation7], 1
    %2141 = vsyncpa [#allocation10], 1
    %2142 = vsyncpa [#allocation5], 1
    %2143 = vsyncpa [#allocation13], 1

</llo_original>
